<compile_context>
chip_gen: v6e
topology: v6e:2x2x1
jax: 0.10.0
libtpu: 0.0.40
codegen_flags: <defaults>
</compile_context>

<pallas_src>
import functools

import jax
import jax.numpy as jnp
import numpy as np
from jax.experimental import pallas as pl
from jax.experimental.pallas import tpu as pltpu


# -----------------------------------------------------------------------------
# Fused Pallas kernel: 4-direction LSTM recurrence + FC epilogue
# -----------------------------------------------------------------------------
def _fused_bilstm_fc_kernel(x_ref, wih_ref, whh_ref, b_ref, fcw_ref, fcb_ref,
                            out_ref):
    """Fused BiLSTM (x2 questions) + final linear layer.

    x_ref   : (T*B, 4E)  bf16  packed embedded inputs, time-major, 4 instances
                               (q1f|q1b|q2f|q2b) concatenated on lanes
    wih_ref : (4E, 16H)  bf16  block-diagonal input->gate weights,
                               columns ordered [i | f | o | g] x instance
    whh_ref : (4H, 16H)  bf16  block-diagonal hidden->gate weights (same cols)
    b_ref   : (1, 16H)   f32   b_ih + b_hh, same column order
    fcw_ref : (4H, 1)    bf16  final linear weights (combined layout)
    fcb_ref : (1, 1)     f32
    out_ref : (B, 1)     f32   logits
    """
    B = out_ref.shape[0]
    T = x_ref.shape[0] // B
    H4 = whh_ref.shape[0]          # packed hidden width = 4 * hidden_size
    SIG = 3 * H4                   # lanes [0, 3*4H): sigmoid gates (i|f|o)

    whh = whh_ref[...]

    # Hoisted input projection: one big MXU matmul + one broadcast bias add
    # for all time steps (replaces T tiny per-step matmuls).
    xw = jnp.dot(x_ref[...], wih_ref[...],
                 preferred_element_type=jnp.float32) + b_ref[...]   # (T*B, 16H)

    h = jnp.zeros((B, H4), jnp.float32)
    c = jnp.zeros((B, H4), jnp.float32)

    # T is static -> fully unrolled recurrence (static slice indices, full
    # scheduler visibility across steps).
    for t in range(T):
        gates = xw[t * B:(t + 1) * B, :] + jnp.dot(
            h.astype(whh.dtype), whh,
            preferred_element_type=jnp.float32)                     # (B, 16H)
        sg = jax.nn.sigmoid(gates[:, :SIG])       # [i | f | o] blocks
        gg = jnp.tanh(gates[:, SIG:])             # [g] block
        i_g = sg[:, 0:H4]
        f_g = sg[:, H4:2 * H4]
        o_g = sg[:, 2 * H4:3 * H4]
        c = f_g * c + i_g * gg
        h = o_g * jnp.tanh(c)

    # h == concat([h_q1_fwd, h_q1_bwd, h_q2_fwd, h_q2_bwd], axis=1) == the
    # "combined" vector of the PyTorch model.  Dropout is identity at
    # inference; FC is the in-kernel epilogue (no HBM round-trip of combined).
    out_ref[...] = (
        jnp.dot(h.astype(fcw_ref.dtype), fcw_ref[...],
                preferred_element_type=jnp.float32) + fcb_ref[...]
    )


# -----------------------------------------------------------------------------
# Wrapper
# -----------------------------------------------------------------------------
_VMEM = pl.BlockSpec(memory_space=pltpu.MemorySpace.VMEM)


@jax.jit
def quora_forward(packed, q1_ids, q2_ids):
    emb = packed["embedding"]                         # (V, E) bf16
    # Gather directly in time-major order: (T, B, E); no HBM transpose.
    x1 = jnp.take(emb, q1_ids.T, axis=0)
    x2 = jnp.take(emb, q2_ids.T, axis=0)
    # Pack the 4 LSTM instances (q1-fwd, q1-bwd, q2-fwd, q2-bwd) on lanes.
    x_packed = jnp.concatenate([x1, x1[::-1], x2, x2[::-1]], axis=-1)  # (T,B,4E)
    T, B, E4 = x_packed.shape
    x_flat = x_packed.reshape(T * B, E4)

    # Everything fits in VMEM at these sizes -> whole-array blocks, single call.
    # TODO(synk): at realistic Quora sizes (T~60, E~300, large B) tile x over a
    # T grid axis ("arbitrary", weights resident) and/or split the 4 instances
    # over a "parallel" grid axis for v7x's 2 TensorCores; set vmem_limit_bytes.
    out = pl.pallas_call(
        _fused_bilstm_fc_kernel,
        out_shape=jax.ShapeDtypeStruct((B, 1), jnp.float32),
        in_specs=[_VMEM] * 6,
        out_specs=_VMEM,
    )(x_flat, packed["wih"], packed["whh"], packed["bias"],
      packed["fc_w"], packed["fc_b"])
    return out[:, 0]


# -----------------------------------------------------------------------------
# Parameters: PyTorch-layout init + one-time repacking for the fused kernel
# -----------------------------------------------------------------------------
def init_params(key, vocab_size, embedding_dim, hidden_size):
    ks = iter(jax.random.split(key, 32))

    def u(shape, scale):
        return jax.random.uniform(next(ks), shape, jnp.float32, -scale, scale)

    H, E = hidden_size, embedding_dim
    k = 1.0 / float(np.sqrt(H))

    def lstm_dir():
        return {
            "w_ih": u((4 * H, E), k),
            "w_hh": u((4 * H, H), k),
            "b_ih": u((4 * H,), k),
            "b_hh": u((4 * H,), k),
        }

    def encoder():
        return {"fwd": lstm_dir(), "bwd": lstm_dir()}

    kf = 1.0 / float(np.sqrt(4 * H))
    return {
        "embedding": jax.random.normal(next(ks), (vocab_size, E), jnp.float32),
        "q1": encoder(),
        "q2": encoder(),
        "fc_w": u((1, 4 * H), kf),
        "fc_b": u((1,), kf),
    }


# PyTorch gate index (i, f, g, o) -> packed gate block (i, f, o, g)
_GATE_BLOCK = (0, 1, 3, 2)


def pack_params(params):
    """One-time repack of PyTorch-layout params into fused-kernel layout."""
    dirs = [params["q1"]["fwd"], params["q1"]["bwd"],
            params["q2"]["fwd"], params["q2"]["bwd"]]
    H = dirs[0]["w_hh"].shape[1]
    E = dirs[0]["w_ih"].shape[1]
    n_inst = len(dirs)
    H4 = n_inst * H            # packed hidden width
    G = 4 * H4                 # total gate width (4 gates x 4 instances x H)

    wih_big = np.zeros((n_inst * E, G), np.float32)
    whh_big = np.zeros((H4, G), np.float32)
    bias_big = np.zeros((G,), np.float32)
    for n, d in enumerate(dirs):
        wih_t = np.asarray(d["w_ih"]).T            # (E, 4H), cols [i,f,g,o]
        whh_t = np.asarray(d["w_hh"]).T            # (H, 4H)
        b = np.asarray(d["b_ih"]) + np.asarray(d["b_hh"])
        for p in range(4):
            col = _GATE_BLOCK[p] * H4 + n * H
            wih_big[n * E:(n + 1) * E, col:col + H] = wih_t[:, p * H:(p + 1) * H]
            whh_big[n * H:(n + 1) * H, col:col + H] = whh_t[:, p * H:(p + 1) * H]
            bias_big[col:col + H] = b[p * H:(p + 1) * H]

    return {
        "embedding": params["embedding"].astype(jnp.bfloat16),
        "wih": jnp.asarray(wih_big, jnp.bfloat16),
        "whh": jnp.asarray(whh_big, jnp.bfloat16),
        "bias": jnp.asarray(bias_big.reshape(1, G), jnp.float32),
        "fc_w": jnp.asarray(np.asarray(params["fc_w"]).T, jnp.bfloat16),  # (4H,1)
        "fc_b": params["fc_b"].reshape(1, 1).astype(jnp.float32),
    }


# -----------------------------------------------------------------------------
# Pure-JAX float32 reference (for a loose sanity check only)
# -----------------------------------------------------------------------------
def _reference_forward(params, q1_ids, q2_ids):
    def lstm_last(x_tbe, d):
        T, B, _ = x_tbe.shape
        H = d["w_hh"].shape[1]
        wih, whh = d["w_ih"].T, d["w_hh"].T
        b = d["b_ih"] + d["b_hh"]
        h = jnp.zeros((B, H)); c = jnp.zeros((B, H))
        for t in range(T):
            g = x_tbe[t] @ wih + h @ whh + b
            i = jax.nn.sigmoid(g[:, :H]); f = jax.nn.sigmoid(g[:, H:2 * H])
            gg = jnp.tanh(g[:, 2 * H:3 * H]); o = jax.nn.sigmoid(g[:, 3 * H:])
            c = f * c + i * gg
            h = o * jnp.tanh(c)
        return h

    def enc(ids, e):
        x = jnp.take(params["embedding"], ids.T, axis=0)
        return jnp.concatenate(
            [lstm_last(x, e["fwd"]), lstm_last(x[::-1], e["bwd"])], axis=1)

    comb = jnp.concatenate([enc(q1_ids, params["q1"]),
                            enc(q2_ids, params["q2"])], axis=1)
    return (comb @ params["fc_w"].T + params["fc_b"])[:, 0]


# -----------------------------------------------------------------------------
# Main
# -----------------------------------------------------------------------------
if __name__ == "__main__":
    VOCAB = 50
    EMB_DIM = 32
    HIDDEN = 32          # hidden_size; 4*H = 128 -> lane-dense packed state
    BATCH = 4
    SEQ = 8

    key = jax.random.PRNGKey(0)
    k_par, k_q1, k_q2 = jax.random.split(key, 3)

    params = init_params(k_par, VOCAB, EMB_DIM, HIDDEN)
    packed = pack_params(params)     # one-time weight repack / transpose / cast

    q1_ids = jax.random.randint(k_q1, (BATCH, SEQ), 0, VOCAB, dtype=jnp.int32)
    q2_ids = jax.random.randint(k_q2, (BATCH, SEQ), 0, VOCAB, dtype=jnp.int32)

    logits = quora_forward(packed, q1_ids, q2_ids)
    jax.block_until_ready(logits)
    assert logits.shape == (BATCH,), logits.shape
    assert bool(jnp.all(jnp.isfinite(logits)))

    # Loose tolerance: kernel feeds the MXU bf16 operands (f32 accumulation).
    ref = np.asarray(_reference_forward(params, q1_ids, q2_ids))
    assert np.allclose(np.asarray(logits), ref, atol=1.5e-1), (
        float(np.max(np.abs(np.asarray(logits) - ref))))

    print("KERNEL_OK")
</pallas_src>

<mosaic_0001>
module attributes {stable_mosaic.version = 11 : i64} {
  func.func @_fused_bilstm_fc_kernel(%arg0: memref<32x128xbf16, #tpu.memory_space<vmem>>, %arg1: memref<128x512xbf16, #tpu.memory_space<vmem>>, %arg2: memref<128x512xbf16, #tpu.memory_space<vmem>>, %arg3: memref<1x512xf32, #tpu.memory_space<vmem>>, %arg4: memref<128x1xbf16, #tpu.memory_space<vmem>>, %arg5: memref<1x1xf32, #tpu.memory_space<vmem>>, %arg6: memref<4x1xf32, #tpu.memory_space<vmem>>) attributes {dimension_semantics = [], scalar_prefetch = 0 : i64, scratch_operands = 0 : i64, tpu.core_type = #tpu.core_type<tc>} {
    %c0 = arith.constant 0 : index
    %c0_0 = arith.constant 0 : index
    %0 = vector.load %arg2[%c0, %c0_0] : memref<128x512xbf16, #tpu.memory_space<vmem>>, vector<128x512xbf16>
    %c0_1 = arith.constant 0 : index
    %c0_2 = arith.constant 0 : index
    %1 = vector.load %arg0[%c0_1, %c0_2] : memref<32x128xbf16, #tpu.memory_space<vmem>>, vector<32x128xbf16>
    %c0_3 = arith.constant 0 : index
    %c0_4 = arith.constant 0 : index
    %2 = vector.load %arg1[%c0_3, %c0_4] : memref<128x512xbf16, #tpu.memory_space<vmem>>, vector<128x512xbf16>
    %cst = arith.constant dense<0.000000e+00> : vector<32x512xf32>
    %3 = tpu.matmul %1, %2, %cst {dimension_numbers = #tpu.dot_dimension_numbers<[1], [0], [0], [1], [0, 0, 1, 1], [], []>} : vector<32x128xbf16>, vector<128x512xbf16>, vector<32x512xf32> -> vector<32x512xf32>
    %c0_5 = arith.constant 0 : index
    %c0_6 = arith.constant 0 : index
    %4 = vector.load %arg3[%c0_5, %c0_6] : memref<1x512xf32, #tpu.memory_space<vmem>>, vector<1x512xf32>
    %5 = vector.broadcast %4 : vector<1x512xf32> to vector<32x512xf32>
    %6 = arith.addf %3, %5 : vector<32x512xf32>
    %cst_7 = arith.constant 0.000000e+00 : f32
    %7 = vector.broadcast %cst_7 : f32 to vector<4x128xf32>
    %cst_8 = arith.constant 0.000000e+00 : f32
    %8 = vector.broadcast %cst_8 : f32 to vector<4x128xf32>
    %9 = vector.extract_strided_slice %6 {offsets = [0, 0], sizes = [4, 512], strides = [1, 1]} : vector<32x512xf32> to vector<4x512xf32>
    %10 = arith.truncf %7 : vector<4x128xf32> to vector<4x128xbf16>
    %cst_9 = arith.constant dense<0.000000e+00> : vector<4x512xf32>
    %11 = tpu.matmul %10, %0, %cst_9 {dimension_numbers = #tpu.dot_dimension_numbers<[1], [0], [0], [1], [0, 0, 1, 1], [], []>} : vector<4x128xbf16>, vector<128x512xbf16>, vector<4x512xf32> -> vector<4x512xf32>
    %12 = arith.addf %9, %11 : vector<4x512xf32>
    %13 = vector.extract_strided_slice %12 {offsets = [0, 0], sizes = [4, 384], strides = [1, 1]} : vector<4x512xf32> to vector<4x384xf32>
    %14 = arith.negf %13 : vector<4x384xf32>
    %15 = math.exp %14 : vector<4x384xf32>
    %cst_10 = arith.constant 1.000000e+00 : f32
    %16 = vector.broadcast %cst_10 : f32 to vector<4x384xf32>
    %17 = arith.addf %16, %15 : vector<4x384xf32>
    %18 = arith.divf %16, %17 : vector<4x384xf32>
    %19 = vector.extract_strided_slice %12 {offsets = [0, 384], sizes = [4, 128], strides = [1, 1]} : vector<4x512xf32> to vector<4x128xf32>
    %20 = math.tanh %19 : vector<4x128xf32>
    %21 = vector.extract_strided_slice %18 {offsets = [0, 0], sizes = [4, 128], strides = [1, 1]} : vector<4x384xf32> to vector<4x128xf32>
    %22 = vector.extract_strided_slice %18 {offsets = [0, 128], sizes = [4, 128], strides = [1, 1]} : vector<4x384xf32> to vector<4x128xf32>
    %23 = vector.extract_strided_slice %18 {offsets = [0, 256], sizes = [4, 128], strides = [1, 1]} : vector<4x384xf32> to vector<4x128xf32>
    %24 = arith.mulf %22, %8 : vector<4x128xf32>
    %25 = arith.mulf %21, %20 : vector<4x128xf32>
    %26 = arith.addf %24, %25 : vector<4x128xf32>
    %27 = math.tanh %26 : vector<4x128xf32>
    %28 = arith.mulf %23, %27 : vector<4x128xf32>
    %29 = vector.extract_strided_slice %6 {offsets = [4, 0], sizes = [4, 512], strides = [1, 1]} : vector<32x512xf32> to vector<4x512xf32>
    %30 = arith.truncf %28 : vector<4x128xf32> to vector<4x128xbf16>
    %cst_11 = arith.constant dense<0.000000e+00> : vector<4x512xf32>
    %31 = tpu.matmul %30, %0, %cst_11 {dimension_numbers = #tpu.dot_dimension_numbers<[1], [0], [0], [1], [0, 0, 1, 1], [], []>} : vector<4x128xbf16>, vector<128x512xbf16>, vector<4x512xf32> -> vector<4x512xf32>
    %32 = arith.addf %29, %31 : vector<4x512xf32>
    %33 = vector.extract_strided_slice %32 {offsets = [0, 0], sizes = [4, 384], strides = [1, 1]} : vector<4x512xf32> to vector<4x384xf32>
    %34 = arith.negf %33 : vector<4x384xf32>
    %35 = math.exp %34 : vector<4x384xf32>
    %cst_12 = arith.constant 1.000000e+00 : f32
    %36 = vector.broadcast %cst_12 : f32 to vector<4x384xf32>
    %37 = arith.addf %36, %35 : vector<4x384xf32>
    %38 = arith.divf %36, %37 : vector<4x384xf32>
    %39 = vector.extract_strided_slice %32 {offsets = [0, 384], sizes = [4, 128], strides = [1, 1]} : vector<4x512xf32> to vector<4x128xf32>
    %40 = math.tanh %39 : vector<4x128xf32>
    %41 = vector.extract_strided_slice %38 {offsets = [0, 0], sizes = [4, 128], strides = [1, 1]} : vector<4x384xf32> to vector<4x128xf32>
    %42 = vector.extract_strided_slice %38 {offsets = [0, 128], sizes = [4, 128], strides = [1, 1]} : vector<4x384xf32> to vector<4x128xf32>
    %43 = vector.extract_strided_slice %38 {offsets = [0, 256], sizes = [4, 128], strides = [1, 1]} : vector<4x384xf32> to vector<4x128xf32>
    %44 = arith.mulf %42, %26 : vector<4x128xf32>
    %45 = arith.mulf %41, %40 : vector<4x128xf32>
    %46 = arith.addf %44, %45 : vector<4x128xf32>
    %47 = math.tanh %46 : vector<4x128xf32>
    %48 = arith.mulf %43, %47 : vector<4x128xf32>
    %49 = vector.extract_strided_slice %6 {offsets = [8, 0], sizes = [4, 512], strides = [1, 1]} : vector<32x512xf32> to vector<4x512xf32>
    %50 = arith.truncf %48 : vector<4x128xf32> to vector<4x128xbf16>
    %cst_13 = arith.constant dense<0.000000e+00> : vector<4x512xf32>
    %51 = tpu.matmul %50, %0, %cst_13 {dimension_numbers = #tpu.dot_dimension_numbers<[1], [0], [0], [1], [0, 0, 1, 1], [], []>} : vector<4x128xbf16>, vector<128x512xbf16>, vector<4x512xf32> -> vector<4x512xf32>
    %52 = arith.addf %49, %51 : vector<4x512xf32>
    %53 = vector.extract_strided_slice %52 {offsets = [0, 0], sizes = [4, 384], strides = [1, 1]} : vector<4x512xf32> to vector<4x384xf32>
    %54 = arith.negf %53 : vector<4x384xf32>
    %55 = math.exp %54 : vector<4x384xf32>
    %cst_14 = arith.constant 1.000000e+00 : f32
    %56 = vector.broadcast %cst_14 : f32 to vector<4x384xf32>
    %57 = arith.addf %56, %55 : vector<4x384xf32>
    %58 = arith.divf %56, %57 : vector<4x384xf32>
    %59 = vector.extract_strided_slice %52 {offsets = [0, 384], sizes = [4, 128], strides = [1, 1]} : vector<4x512xf32> to vector<4x128xf32>
    %60 = math.tanh %59 : vector<4x128xf32>
    %61 = vector.extract_strided_slice %58 {offsets = [0, 0], sizes = [4, 128], strides = [1, 1]} : vector<4x384xf32> to vector<4x128xf32>
    %62 = vector.extract_strided_slice %58 {offsets = [0, 128], sizes = [4, 128], strides = [1, 1]} : vector<4x384xf32> to vector<4x128xf32>
    %63 = vector.extract_strided_slice %58 {offsets = [0, 256], sizes = [4, 128], strides = [1, 1]} : vector<4x384xf32> to vector<4x128xf32>
    %64 = arith.mulf %62, %46 : vector<4x128xf32>
    %65 = arith.mulf %61, %60 : vector<4x128xf32>
    %66 = arith.addf %64, %65 : vector<4x128xf32>
    %67 = math.tanh %66 : vector<4x128xf32>
    %68 = arith.mulf %63, %67 : vector<4x128xf32>
    %69 = vector.extract_strided_slice %6 {offsets = [12, 0], sizes = [4, 512], strides = [1, 1]} : vector<32x512xf32> to vector<4x512xf32>
    %70 = arith.truncf %68 : vector<4x128xf32> to vector<4x128xbf16>
    %cst_15 = arith.constant dense<0.000000e+00> : vector<4x512xf32>
    %71 = tpu.matmul %70, %0, %cst_15 {dimension_numbers = #tpu.dot_dimension_numbers<[1], [0], [0], [1], [0, 0, 1, 1], [], []>} : vector<4x128xbf16>, vector<128x512xbf16>, vector<4x512xf32> -> vector<4x512xf32>
    %72 = arith.addf %69, %71 : vector<4x512xf32>
    %73 = vector.extract_strided_slice %72 {offsets = [0, 0], sizes = [4, 384], strides = [1, 1]} : vector<4x512xf32> to vector<4x384xf32>
    %74 = arith.negf %73 : vector<4x384xf32>
    %75 = math.exp %74 : vector<4x384xf32>
    %cst_16 = arith.constant 1.000000e+00 : f32
    %76 = vector.broadcast %cst_16 : f32 to vector<4x384xf32>
    %77 = arith.addf %76, %75 : vector<4x384xf32>
    %78 = arith.divf %76, %77 : vector<4x384xf32>
    %79 = vector.extract_strided_slice %72 {offsets = [0, 384], sizes = [4, 128], strides = [1, 1]} : vector<4x512xf32> to vector<4x128xf32>
    %80 = math.tanh %79 : vector<4x128xf32>
    %81 = vector.extract_strided_slice %78 {offsets = [0, 0], sizes = [4, 128], strides = [1, 1]} : vector<4x384xf32> to vector<4x128xf32>
    %82 = vector.extract_strided_slice %78 {offsets = [0, 128], sizes = [4, 128], strides = [1, 1]} : vector<4x384xf32> to vector<4x128xf32>
    %83 = vector.extract_strided_slice %78 {offsets = [0, 256], sizes = [4, 128], strides = [1, 1]} : vector<4x384xf32> to vector<4x128xf32>
    %84 = arith.mulf %82, %66 : vector<4x128xf32>
    %85 = arith.mulf %81, %80 : vector<4x128xf32>
    %86 = arith.addf %84, %85 : vector<4x128xf32>
    %87 = math.tanh %86 : vector<4x128xf32>
    %88 = arith.mulf %83, %87 : vector<4x128xf32>
    %89 = vector.extract_strided_slice %6 {offsets = [16, 0], sizes = [4, 512], strides = [1, 1]} : vector<32x512xf32> to vector<4x512xf32>
    %90 = arith.truncf %88 : vector<4x128xf32> to vector<4x128xbf16>
    %cst_17 = arith.constant dense<0.000000e+00> : vector<4x512xf32>
    %91 = tpu.matmul %90, %0, %cst_17 {dimension_numbers = #tpu.dot_dimension_numbers<[1], [0], [0], [1], [0, 0, 1, 1], [], []>} : vector<4x128xbf16>, vector<128x512xbf16>, vector<4x512xf32> -> vector<4x512xf32>
    %92 = arith.addf %89, %91 : vector<4x512xf32>
    %93 = vector.extract_strided_slice %92 {offsets = [0, 0], sizes = [4, 384], strides = [1, 1]} : vector<4x512xf32> to vector<4x384xf32>
    %94 = arith.negf %93 : vector<4x384xf32>
    %95 = math.exp %94 : vector<4x384xf32>
    %cst_18 = arith.constant 1.000000e+00 : f32
    %96 = vector.broadcast %cst_18 : f32 to vector<4x384xf32>
    %97 = arith.addf %96, %95 : vector<4x384xf32>
    %98 = arith.divf %96, %97 : vector<4x384xf32>
    %99 = vector.extract_strided_slice %92 {offsets = [0, 384], sizes = [4, 128], strides = [1, 1]} : vector<4x512xf32> to vector<4x128xf32>
    %100 = math.tanh %99 : vector<4x128xf32>
    %101 = vector.extract_strided_slice %98 {offsets = [0, 0], sizes = [4, 128], strides = [1, 1]} : vector<4x384xf32> to vector<4x128xf32>
    %102 = vector.extract_strided_slice %98 {offsets = [0, 128], sizes = [4, 128], strides = [1, 1]} : vector<4x384xf32> to vector<4x128xf32>
    %103 = vector.extract_strided_slice %98 {offsets = [0, 256], sizes = [4, 128], strides = [1, 1]} : vector<4x384xf32> to vector<4x128xf32>
    %104 = arith.mulf %102, %86 : vector<4x128xf32>
    %105 = arith.mulf %101, %100 : vector<4x128xf32>
    %106 = arith.addf %104, %105 : vector<4x128xf32>
    %107 = math.tanh %106 : vector<4x128xf32>
    %108 = arith.mulf %103, %107 : vector<4x128xf32>
    %109 = vector.extract_strided_slice %6 {offsets = [20, 0], sizes = [4, 512], strides = [1, 1]} : vector<32x512xf32> to vector<4x512xf32>
    %110 = arith.truncf %108 : vector<4x128xf32> to vector<4x128xbf16>
    %cst_19 = arith.constant dense<0.000000e+00> : vector<4x512xf32>
    %111 = tpu.matmul %110, %0, %cst_19 {dimension_numbers = #tpu.dot_dimension_numbers<[1], [0], [0], [1], [0, 0, 1, 1], [], []>} : vector<4x128xbf16>, vector<128x512xbf16>, vector<4x512xf32> -> vector<4x512xf32>
    %112 = arith.addf %109, %111 : vector<4x512xf32>
    %113 = vector.extract_strided_slice %112 {offsets = [0, 0], sizes = [4, 384], strides = [1, 1]} : vector<4x512xf32> to vector<4x384xf32>
    %114 = arith.negf %113 : vector<4x384xf32>
    %115 = math.exp %114 : vector<4x384xf32>
    %cst_20 = arith.constant 1.000000e+00 : f32
    %116 = vector.broadcast %cst_20 : f32 to vector<4x384xf32>
    %117 = arith.addf %116, %115 : vector<4x384xf32>
    %118 = arith.divf %116, %117 : vector<4x384xf32>
    %119 = vector.extract_strided_slice %112 {offsets = [0, 384], sizes = [4, 128], strides = [1, 1]} : vector<4x512xf32> to vector<4x128xf32>
    %120 = math.tanh %119 : vector<4x128xf32>
    %121 = vector.extract_strided_slice %118 {offsets = [0, 0], sizes = [4, 128], strides = [1, 1]} : vector<4x384xf32> to vector<4x128xf32>
    %122 = vector.extract_strided_slice %118 {offsets = [0, 128], sizes = [4, 128], strides = [1, 1]} : vector<4x384xf32> to vector<4x128xf32>
    %123 = vector.extract_strided_slice %118 {offsets = [0, 256], sizes = [4, 128], strides = [1, 1]} : vector<4x384xf32> to vector<4x128xf32>
    %124 = arith.mulf %122, %106 : vector<4x128xf32>
    %125 = arith.mulf %121, %120 : vector<4x128xf32>
    %126 = arith.addf %124, %125 : vector<4x128xf32>
    %127 = math.tanh %126 : vector<4x128xf32>
    %128 = arith.mulf %123, %127 : vector<4x128xf32>
    %129 = vector.extract_strided_slice %6 {offsets = [24, 0], sizes = [4, 512], strides = [1, 1]} : vector<32x512xf32> to vector<4x512xf32>
    %130 = arith.truncf %128 : vector<4x128xf32> to vector<4x128xbf16>
    %cst_21 = arith.constant dense<0.000000e+00> : vector<4x512xf32>
    %131 = tpu.matmul %130, %0, %cst_21 {dimension_numbers = #tpu.dot_dimension_numbers<[1], [0], [0], [1], [0, 0, 1, 1], [], []>} : vector<4x128xbf16>, vector<128x512xbf16>, vector<4x512xf32> -> vector<4x512xf32>
    %132 = arith.addf %129, %131 : vector<4x512xf32>
    %133 = vector.extract_strided_slice %132 {offsets = [0, 0], sizes = [4, 384], strides = [1, 1]} : vector<4x512xf32> to vector<4x384xf32>
    %134 = arith.negf %133 : vector<4x384xf32>
    %135 = math.exp %134 : vector<4x384xf32>
    %cst_22 = arith.constant 1.000000e+00 : f32
    %136 = vector.broadcast %cst_22 : f32 to vector<4x384xf32>
    %137 = arith.addf %136, %135 : vector<4x384xf32>
    %138 = arith.divf %136, %137 : vector<4x384xf32>
    %139 = vector.extract_strided_slice %132 {offsets = [0, 384], sizes = [4, 128], strides = [1, 1]} : vector<4x512xf32> to vector<4x128xf32>
    %140 = math.tanh %139 : vector<4x128xf32>
    %141 = vector.extract_strided_slice %138 {offsets = [0, 0], sizes = [4, 128], strides = [1, 1]} : vector<4x384xf32> to vector<4x128xf32>
    %142 = vector.extract_strided_slice %138 {offsets = [0, 128], sizes = [4, 128], strides = [1, 1]} : vector<4x384xf32> to vector<4x128xf32>
    %143 = vector.extract_strided_slice %138 {offsets = [0, 256], sizes = [4, 128], strides = [1, 1]} : vector<4x384xf32> to vector<4x128xf32>
    %144 = arith.mulf %142, %126 : vector<4x128xf32>
    %145 = arith.mulf %141, %140 : vector<4x128xf32>
    %146 = arith.addf %144, %145 : vector<4x128xf32>
    %147 = math.tanh %146 : vector<4x128xf32>
    %148 = arith.mulf %143, %147 : vector<4x128xf32>
    %149 = vector.extract_strided_slice %6 {offsets = [28, 0], sizes = [4, 512], strides = [1, 1]} : vector<32x512xf32> to vector<4x512xf32>
    %150 = arith.truncf %148 : vector<4x128xf32> to vector<4x128xbf16>
    %cst_23 = arith.constant dense<0.000000e+00> : vector<4x512xf32>
    %151 = tpu.matmul %150, %0, %cst_23 {dimension_numbers = #tpu.dot_dimension_numbers<[1], [0], [0], [1], [0, 0, 1, 1], [], []>} : vector<4x128xbf16>, vector<128x512xbf16>, vector<4x512xf32> -> vector<4x512xf32>
    %152 = arith.addf %149, %151 : vector<4x512xf32>
    %153 = vector.extract_strided_slice %152 {offsets = [0, 0], sizes = [4, 384], strides = [1, 1]} : vector<4x512xf32> to vector<4x384xf32>
    %154 = arith.negf %153 : vector<4x384xf32>
    %155 = math.exp %154 : vector<4x384xf32>
    %cst_24 = arith.constant 1.000000e+00 : f32
    %156 = vector.broadcast %cst_24 : f32 to vector<4x384xf32>
    %157 = arith.addf %156, %155 : vector<4x384xf32>
    %158 = arith.divf %156, %157 : vector<4x384xf32>
    %159 = vector.extract_strided_slice %152 {offsets = [0, 384], sizes = [4, 128], strides = [1, 1]} : vector<4x512xf32> to vector<4x128xf32>
    %160 = math.tanh %159 : vector<4x128xf32>
    %161 = vector.extract_strided_slice %158 {offsets = [0, 0], sizes = [4, 128], strides = [1, 1]} : vector<4x384xf32> to vector<4x128xf32>
    %162 = vector.extract_strided_slice %158 {offsets = [0, 128], sizes = [4, 128], strides = [1, 1]} : vector<4x384xf32> to vector<4x128xf32>
    %163 = vector.extract_strided_slice %158 {offsets = [0, 256], sizes = [4, 128], strides = [1, 1]} : vector<4x384xf32> to vector<4x128xf32>
    %164 = arith.mulf %162, %146 : vector<4x128xf32>
    %165 = arith.mulf %161, %160 : vector<4x128xf32>
    %166 = arith.addf %164, %165 : vector<4x128xf32>
    %167 = math.tanh %166 : vector<4x128xf32>
    %168 = arith.mulf %163, %167 : vector<4x128xf32>
    %169 = arith.truncf %168 : vector<4x128xf32> to vector<4x128xbf16>
    %c0_25 = arith.constant 0 : index
    %c0_26 = arith.constant 0 : index
    %170 = vector.load %arg4[%c0_25, %c0_26] : memref<128x1xbf16, #tpu.memory_space<vmem>>, vector<128x1xbf16>
    %cst_27 = arith.constant dense<0.000000e+00> : vector<4x1xf32>
    %171 = tpu.matmul %169, %170, %cst_27 {dimension_numbers = #tpu.dot_dimension_numbers<[1], [0], [0], [1], [0, 0, 1, 1], [], []>} : vector<4x128xbf16>, vector<128x1xbf16>, vector<4x1xf32> -> vector<4x1xf32>
    %c0_28 = arith.constant 0 : index
    %c0_29 = arith.constant 0 : index
    %172 = vector.load %arg5[%c0_28, %c0_29] : memref<1x1xf32, #tpu.memory_space<vmem>>, vector<1x1xf32>
    %173 = vector.broadcast %172 : vector<1x1xf32> to vector<4x1xf32>
    %174 = arith.addf %171, %173 : vector<4x1xf32>
    %c0_30 = arith.constant 0 : index
    %c0_31 = arith.constant 0 : index
    %175 = vector.load %arg6[%c0_30, %c0_31] : memref<4x1xf32, #tpu.memory_space<vmem>>, vector<4x1xf32>
    tpu.vector_store %arg6[%c0_30, %c0_31], %174 {strides = array<i32>} : memref<4x1xf32, #tpu.memory_space<vmem>>, vector<4x1xf32>,
    return
  }
}

</mosaic_0001>

<llo_original>
// kernel: quora_forward.1
$region0: #{quora_forward.1}
  #allocation0 [shape = 'u32[]', space=smem, size = 0x4, offset = 0x4, fixed_abs, tag = 'smem constant byte address 0x4 - core index']
  #allocation1 [shape = 'u32[144,128]{1,0:T(1,128)}', space=vmem, size = 0x12000, scoped, tag = 'internal scratch']
  #allocation2 [shape = 'f32[1,1]{1,0:T(1,128)S(1)}', space=vmem, size = 0x200, scoped, tag = 'scoped memory for quora_forward.1']
  %s0 = inlined_call_operand.vmem [shape: bf16[32,128], index: 0, kind: input, shape index: {}]
  %s1 = inlined_call_operand.vmem [shape: bf16[128,512], index: 1, kind: input, shape index: {}]
  %s2 = inlined_call_operand.vmem [shape: bf16[128,512], index: 2, kind: input, shape index: {}]
  %s3 = inlined_call_operand.vmem [shape: f32[1,512], index: 3, kind: input, shape index: {}]
  %s4 = inlined_call_operand.vmem [shape: bf16[128,1], index: 4, kind: input, shape index: {}]
  %s5 = inlined_call_operand.<no memory space> [shape: f32[1,1], index: 5, kind: input, shape index: {}]
  %s6 = inlined_call_operand.vmem [shape: f32[4,1], index: 6, kind: output, shape index: {}]
  %s7 = sld [smem:[#allocation0]]
  $region34: #{quora_forward.1} parent=0
    _
  %s9 = ssub.s32 1, %s7
  %s10 = scalar_select 0, %s9, %s7
  %v11 = vstv %s5
  %12 = vst [vmem:[#allocation2] sm:$0x1] %v11
  // Predicated region
  $region2: #{quora_forward.1} parent=0 // pred_check
    _
  $region3: #{quora_forward.1} parent=0 // pred_check_branch
    %14 = sbr.rel (0) target = $region5
  $region4: #{quora_forward.1} parent=0 // pred_region
    _
  $region5: #{quora_forward.1} parent=0 // pred_fallthru
    _
  // Predicated region
  $region6: #{quora_forward.1} parent=0 // pred_check
    _
  $region7: #{quora_forward.1} parent=0 // pred_check_branch
    %16 = sbr.rel (0) target = $region9
  $region8: #{quora_forward.1} parent=0 // pred_region
    _
  $region9: #{quora_forward.1} parent=0 // pred_fallthru
    _
  // Predicated region
  $region10: #{quora_forward.1} parent=0 // pred_check
    _
  $region11: #{quora_forward.1} parent=0 // pred_check_branch
    %18 = sbr.rel (0) target = $region13
  $region12: #{quora_forward.1} parent=0 // pred_region
    _
  $region13: #{quora_forward.1} parent=0 // pred_fallthru
    _
  // Predicated region
  $region14: #{quora_forward.1} parent=0 // pred_check
    _
  $region15: #{quora_forward.1} parent=0 // pred_check_branch
    %20 = sbr.rel (0) target = $region17
  $region16: #{quora_forward.1} parent=0 // pred_region
    _
  $region17: #{quora_forward.1} parent=0 // pred_fallthru
    _
  // Predicated region
  $region18: #{quora_forward.1} parent=0 // pred_check
    _
  $region19: #{quora_forward.1} parent=0 // pred_check_branch
    %22 = sbr.rel (0) target = $region21
  $region20: #{quora_forward.1} parent=0 // pred_region
    _
  $region21: #{quora_forward.1} parent=0 // pred_fallthru
    _
  // Predicated region
  $region22: #{quora_forward.1} parent=0 // pred_check
    _
  $region23: #{quora_forward.1} parent=0 // pred_check_branch
    %24 = sbr.rel (0) target = $region25
  $region24: #{quora_forward.1} parent=0 // pred_region
    _
  $region25: #{quora_forward.1} parent=0 // pred_fallthru
    _
  %v26 = vld [vmem:[%s2] sm:$0xff]
  %v27 = vld [vmem:[%s2 + $0x8] sm:$0xff]
  %v28 = vld [vmem:[%s2 + $0x10] sm:$0xff]
  %v29 = vld [vmem:[%s2 + $0x18] sm:$0xff]
  %v30 = vld [vmem:[%s2 + $0x20] sm:$0xff]
  %v31 = vld [vmem:[%s2 + $0x28] sm:$0xff]
  %v32 = vld [vmem:[%s2 + $0x30] sm:$0xff]
  %v33 = vld [vmem:[%s2 + $0x38] sm:$0xff]
  %v34 = vld [vmem:[%s2 + $0x40] sm:$0xff]
  %v35 = vld [vmem:[%s2 + $0x48] sm:$0xff]
  %v36 = vld [vmem:[%s2 + $0x50] sm:$0xff]
  %v37 = vld [vmem:[%s2 + $0x58] sm:$0xff]
  %v38 = vld [vmem:[%s2 + $0x60] sm:$0xff]
  %v39 = vld [vmem:[%s2 + $0x68] sm:$0xff]
  %v40 = vld [vmem:[%s2 + $0x70] sm:$0xff]
  %v41 = vld [vmem:[%s2 + $0x78] sm:$0xff]
  %v42 = vld [vmem:[%s2 + $0x80] sm:$0xff]
  %v43 = vld [vmem:[%s2 + $0x88] sm:$0xff]
  %v44 = vld [vmem:[%s2 + $0x90] sm:$0xff]
  %v45 = vld [vmem:[%s2 + $0x98] sm:$0xff]
  %v46 = vld [vmem:[%s2 + $0xa0] sm:$0xff]
  %v47 = vld [vmem:[%s2 + $0xa8] sm:$0xff]
  %v48 = vld [vmem:[%s2 + $0xb0] sm:$0xff]
  %v49 = vld [vmem:[%s2 + $0xb8] sm:$0xff]
  %v50 = vld [vmem:[%s2 + $0xc0] sm:$0xff]
  %v51 = vld [vmem:[%s2 + $0xc8] sm:$0xff]
  %v52 = vld [vmem:[%s2 + $0xd0] sm:$0xff]
  %v53 = vld [vmem:[%s2 + $0xd8] sm:$0xff]
  %v54 = vld [vmem:[%s2 + $0xe0] sm:$0xff]
  %v55 = vld [vmem:[%s2 + $0xe8] sm:$0xff]
  %v56 = vld [vmem:[%s2 + $0xf0] sm:$0xff]
  %v57 = vld [vmem:[%s2 + $0xf8] sm:$0xff]
  %v58 = vld [vmem:[%s0] sm:$0xf]
  %v59 = vld [vmem:[%s0 + $0x4] sm:$0xf]
  %v60 = vld [vmem:[%s0 + $0x8] sm:$0xf]
  %v61 = vld [vmem:[%s0 + $0xc] sm:$0xf]
  %v62 = vld [vmem:[%s1] sm:$0xff]
  %v63 = vld [vmem:[%s1 + $0x8] sm:$0xff]
  %v64 = vld [vmem:[%s1 + $0x10] sm:$0xff]
  %v65 = vld [vmem:[%s1 + $0x18] sm:$0xff]
  %v66 = vld [vmem:[%s1 + $0x20] sm:$0xff]
  %v67 = vld [vmem:[%s1 + $0x28] sm:$0xff]
  %v68 = vld [vmem:[%s1 + $0x30] sm:$0xff]
  %v69 = vld [vmem:[%s1 + $0x38] sm:$0xff]
  %v70 = vld [vmem:[%s1 + $0x40] sm:$0xff]
  %v71 = vld [vmem:[%s1 + $0x48] sm:$0xff]
  %v72 = vld [vmem:[%s1 + $0x50] sm:$0xff]
  %v73 = vld [vmem:[%s1 + $0x58] sm:$0xff]
  %v74 = vld [vmem:[%s1 + $0x60] sm:$0xff]
  %v75 = vld [vmem:[%s1 + $0x68] sm:$0xff]
  %v76 = vld [vmem:[%s1 + $0x70] sm:$0xff]
  %v77 = vld [vmem:[%s1 + $0x78] sm:$0xff]
  %v78 = vld [vmem:[%s1 + $0x80] sm:$0xff]
  %v79 = vld [vmem:[%s1 + $0x88] sm:$0xff]
  %v80 = vld [vmem:[%s1 + $0x90] sm:$0xff]
  %v81 = vld [vmem:[%s1 + $0x98] sm:$0xff]
  %v82 = vld [vmem:[%s1 + $0xa0] sm:$0xff]
  %v83 = vld [vmem:[%s1 + $0xa8] sm:$0xff]
  %v84 = vld [vmem:[%s1 + $0xb0] sm:$0xff]
  %v85 = vld [vmem:[%s1 + $0xb8] sm:$0xff]
  %v86 = vld [vmem:[%s1 + $0xc0] sm:$0xff]
  %v87 = vld [vmem:[%s1 + $0xc8] sm:$0xff]
  %v88 = vld [vmem:[%s1 + $0xd0] sm:$0xff]
  %v89 = vld [vmem:[%s1 + $0xd8] sm:$0xff]
  %v90 = vld [vmem:[%s1 + $0xe0] sm:$0xff]
  %v91 = vld [vmem:[%s1 + $0xe8] sm:$0xff]
  %v92 = vld [vmem:[%s1 + $0xf0] sm:$0xff]
  %v93 = vld [vmem:[%s1 + $0xf8] sm:$0xff]
  %v94 = vld [vmem:[%s3] sm:$0xf]
  %v96 = vlaneseq
  %v97 = vshrl.u32 %v96, 7
  %v98 = vsub.s32 0, %v97
  %v99 = vrot.slane %v94, %v98
  %v100 = vlaneseq
  %v101 = vshrl.u32 %v100, 7
  %v102 = vsub.s32 1, %v101
  %v103 = vrot.slane %v94, %v102
  %v104 = vlaneseq
  %v105 = vshrl.u32 %v104, 7
  %v106 = vsub.s32 2, %v105
  %v107 = vrot.slane %v94, %v106
  %v108 = vlaneseq
  %v109 = vshrl.u32 %v108, 7
  %v110 = vsub.s32 3, %v109
  %v111 = vrot.slane %v94, %v110
  %v120 = vunpack.c.l.b16 %v58
  %v121 = vunpack.c.l.b16 %v59
  %v122 = vunpack.c.l.b16 %v60
  %v123 = vunpack.c.l.b16 %v61
  %v124 = vpack.c.b16 %v121, %v120
  %v125 = vpack.c.b16 %v123, %v122
  %v160 = vunpack.c.l.b16 %v62
  %v161 = vunpack.c.h.b16 %v62
  %v162 = vunpack.c.l.b16 %v63
  %v163 = vunpack.c.h.b16 %v63
  %v164 = vunpack.c.l.b16 %v64
  %v165 = vunpack.c.h.b16 %v64
  %v166 = vunpack.c.l.b16 %v65
  %v167 = vunpack.c.h.b16 %v65
  %v168 = vunpack.c.l.b16 %v66
  %v169 = vunpack.c.h.b16 %v66
  %v170 = vunpack.c.l.b16 %v67
  %v171 = vunpack.c.h.b16 %v67
  %v172 = vunpack.c.l.b16 %v68
  %v173 = vunpack.c.h.b16 %v68
  %v174 = vunpack.c.l.b16 %v69
  %v175 = vunpack.c.h.b16 %v69
  %v176 = vunpack.c.l.b16 %v70
  %v177 = vunpack.c.h.b16 %v70
  %v178 = vunpack.c.l.b16 %v71
  %v179 = vunpack.c.h.b16 %v71
  %v180 = vunpack.c.l.b16 %v72
  %v181 = vunpack.c.h.b16 %v72
  %v182 = vunpack.c.l.b16 %v73
  %v183 = vunpack.c.h.b16 %v73
  %v184 = vunpack.c.l.b16 %v74
  %v185 = vunpack.c.h.b16 %v74
  %v186 = vunpack.c.l.b16 %v75
  %v187 = vunpack.c.h.b16 %v75
  %v188 = vunpack.c.l.b16 %v76
  %v189 = vunpack.c.h.b16 %v76
  %v190 = vunpack.c.l.b16 %v77
  %v191 = vunpack.c.h.b16 %v77
  %v192 = vunpack.c.l.b16 %v78
  %v193 = vunpack.c.h.b16 %v78
  %v194 = vunpack.c.l.b16 %v79
  %v195 = vunpack.c.h.b16 %v79
  %v196 = vunpack.c.l.b16 %v80
  %v197 = vunpack.c.h.b16 %v80
  %v198 = vunpack.c.l.b16 %v81
  %v199 = vunpack.c.h.b16 %v81
  %v200 = vunpack.c.l.b16 %v82
  %v201 = vunpack.c.h.b16 %v82
  %v202 = vunpack.c.l.b16 %v83
  %v203 = vunpack.c.h.b16 %v83
  %v204 = vunpack.c.l.b16 %v84
  %v205 = vunpack.c.h.b16 %v84
  %v206 = vunpack.c.l.b16 %v85
  %v207 = vunpack.c.h.b16 %v85
  %v208 = vunpack.c.l.b16 %v86
  %v209 = vunpack.c.h.b16 %v86
  %v210 = vunpack.c.l.b16 %v87
  %v211 = vunpack.c.h.b16 %v87
  %v212 = vunpack.c.l.b16 %v88
  %v213 = vunpack.c.h.b16 %v88
  %v214 = vunpack.c.l.b16 %v89
  %v215 = vunpack.c.h.b16 %v89
  %v216 = vunpack.c.l.b16 %v90
  %v217 = vunpack.c.h.b16 %v90
  %v218 = vunpack.c.l.b16 %v91
  %v219 = vunpack.c.h.b16 %v91
  %v220 = vunpack.c.l.b16 %v92
  %v221 = vunpack.c.h.b16 %v92
  %v222 = vunpack.c.l.b16 %v93
  %v223 = vunpack.c.h.b16 %v93
  %v224 = vpack.c.b16 %v164, %v160
  %v225 = vpack.c.b16 %v165, %v161
  %v226 = vpack.c.b16 %v166, %v162
  %v227 = vpack.c.b16 %v167, %v163
  %v228 = vpack.c.b16 %v172, %v168
  %v229 = vpack.c.b16 %v173, %v169
  %v230 = vpack.c.b16 %v174, %v170
  %v231 = vpack.c.b16 %v175, %v171
  %v232 = vpack.c.b16 %v180, %v176
  %v233 = vpack.c.b16 %v181, %v177
  %v234 = vpack.c.b16 %v182, %v178
  %v235 = vpack.c.b16 %v183, %v179
  %v236 = vpack.c.b16 %v188, %v184
  %v237 = vpack.c.b16 %v189, %v185
  %v238 = vpack.c.b16 %v190, %v186
  %v239 = vpack.c.b16 %v191, %v187
  %v240 = vpack.c.b16 %v196, %v192
  %v241 = vpack.c.b16 %v197, %v193
  %v242 = vpack.c.b16 %v198, %v194
  %v243 = vpack.c.b16 %v199, %v195
  %v244 = vpack.c.b16 %v204, %v200
  %v245 = vpack.c.b16 %v205, %v201
  %v246 = vpack.c.b16 %v206, %v202
  %v247 = vpack.c.b16 %v207, %v203
  %v248 = vpack.c.b16 %v212, %v208
  %v249 = vpack.c.b16 %v213, %v209
  %v250 = vpack.c.b16 %v214, %v210
  %v251 = vpack.c.b16 %v215, %v211
  %v252 = vpack.c.b16 %v220, %v216
  %v253 = vpack.c.b16 %v221, %v217
  %v254 = vpack.c.b16 %v222, %v218
  %v255 = vpack.c.b16 %v223, %v219
  %288 = vmatprep.subr.bf16.mxu0 %v253
  %289 = vmatpush1.bf16.msra.mxu0 %v252
  %290 = vmatprep.subr.bf16.mxu0 %v249
  %291 = vmatpush1.bf16.msra.mxu0 %v248
  %292 = vmatprep.subr.bf16.mxu0 %v245
  %293 = vmatpush1.bf16.msra.mxu0 %v244
  %294 = vmatprep.subr.bf16.mxu0 %v241
  %295 = vmatpush1.bf16.msra.mxu0 %v240
  %296 = vmatprep.subr.bf16.mxu0 %v237
  %297 = vmatpush1.bf16.msra.mxu0 %v236
  %298 = vmatprep.subr.bf16.mxu0 %v233
  %299 = vmatpush1.bf16.msra.mxu0 %v232
  %300 = vmatprep.subr.bf16.mxu0 %v229
  %301 = vmatpush1.bf16.msra.mxu0 %v228
  %302 = vmatprep.subr.bf16.mxu0 %v225
  %303 = vmatpush1.bf16.msra.mxu0 %v224
  %304 = vmatprep.subr.bf16.mxu0 0
  %305 = vmatpush2.bf16.msra.mxu0 0
  %306 = vmatprep.subr.bf16.mxu0 0
  %307 = vmatpush2.bf16.msra.mxu0 0
  %308 = vmatprep.subr.bf16.mxu0 0
  %309 = vmatpush2.bf16.msra.mxu0 0
  %310 = vmatprep.subr.bf16.mxu0 0
  %311 = vmatpush2.bf16.msra.mxu0 0
  %312 = vmatprep.subr.bf16.mxu0 0
  %313 = vmatpush2.bf16.msra.mxu0 0
  %314 = vmatprep.subr.bf16.mxu0 0
  %315 = vmatpush2.bf16.msra.mxu0 0
  %316 = vmatprep.subr.bf16.mxu0 0
  %317 = vmatpush2.bf16.msra.mxu0 0
  %318 = vmatprep.subr.bf16.mxu0 0
  %319 = vmatpush2.bf16.msra.mxu0 0
  %320 = vmatprep.mubr.bf16.mxu0 0
  %321 = vmatmul.mubr.bf16.gmra.mxu0 %v124
  %v322 = vpop.f32.mrf.mxu0
  %v323 = vadd.f32 %v99, %v322
  %v324 = vpop.f32.mrf.mxu0
  %v325 = vadd.f32 %v103, %v324
  %v326 = vpop.f32.mrf.mxu0
  %v327 = vadd.f32 %v99, %v326
  %v328 = vpop.f32.mrf.mxu0
  %v329 = vadd.f32 %v103, %v328
  %330 = vmatprep.mubr.bf16.mxu0 0
  %331 = vmatmul.mubr.bf16.gmra.mxu0 %v125
  %v332 = vpop.f32.mrf.mxu0
  %v333 = vadd.f32 %v99, %v332
  %v334 = vpop.f32.mrf.mxu0
  %v335 = vadd.f32 %v103, %v334
  %v336 = vpop.f32.mrf.mxu0
  %v337 = vadd.f32 %v99, %v336
  %v338 = vpop.f32.mrf.mxu0
  %v339 = vadd.f32 %v103, %v338
  %340 = vdwg.mxu0
  %341 = vmatprep.subr.bf16.mxu0 %v255
  %342 = vmatpush1.bf16.msra.mxu0 %v254
  %343 = vmatprep.subr.bf16.mxu0 %v251
  %344 = vmatpush1.bf16.msra.mxu0 %v250
  %345 = vmatprep.subr.bf16.mxu0 %v247
  %346 = vmatpush1.bf16.msra.mxu0 %v246
  %347 = vmatprep.subr.bf16.mxu0 %v243
  %348 = vmatpush1.bf16.msra.mxu0 %v242
  %349 = vmatprep.subr.bf16.mxu0 %v239
  %350 = vmatpush1.bf16.msra.mxu0 %v238
  %351 = vmatprep.subr.bf16.mxu0 %v235
  %352 = vmatpush1.bf16.msra.mxu0 %v234
  %353 = vmatprep.subr.bf16.mxu0 %v231
  %354 = vmatpush1.bf16.msra.mxu0 %v230
  %355 = vmatprep.subr.bf16.mxu0 %v227
  %356 = vmatpush1.bf16.msra.mxu0 %v226
  %357 = vmatprep.subr.bf16.mxu0 0
  %358 = vmatpush2.bf16.msra.mxu0 0
  %359 = vmatprep.subr.bf16.mxu0 0
  %360 = vmatpush2.bf16.msra.mxu0 0
  %361 = vmatprep.subr.bf16.mxu0 0
  %362 = vmatpush2.bf16.msra.mxu0 0
  %363 = vmatprep.subr.bf16.mxu0 0
  %364 = vmatpush2.bf16.msra.mxu0 0
  %365 = vmatprep.subr.bf16.mxu0 0
  %366 = vmatpush2.bf16.msra.mxu0 0
  %367 = vmatprep.subr.bf16.mxu0 0
  %368 = vmatpush2.bf16.msra.mxu0 0
  %369 = vmatprep.subr.bf16.mxu0 0
  %370 = vmatpush2.bf16.msra.mxu0 0
  %371 = vmatprep.subr.bf16.mxu0 0
  %372 = vmatpush2.bf16.msra.mxu0 0
  %373 = vmatprep.mubr.bf16.mxu0 0
  %374 = vmatmul.mubr.bf16.gmra.mxu0 %v124
  %v375 = vpop.f32.mrf.mxu0
  %v376 = vadd.f32 %v107, %v375
  %v377 = vpop.f32.mrf.mxu0
  %v378 = vadd.f32 %v111, %v377
  %v379 = vpop.f32.mrf.mxu0
  %v380 = vadd.f32 %v107, %v379
  %v381 = vpop.f32.mrf.mxu0
  %v382 = vadd.f32 %v111, %v381
  %383 = vmatprep.mubr.bf16.mxu0 0
  %384 = vmatmul.mubr.bf16.gmra.mxu0 %v125
  %v385 = vpop.f32.mrf.mxu0
  %v386 = vadd.f32 %v107, %v385
  %v387 = vpop.f32.mrf.mxu0
  %v388 = vadd.f32 %v111, %v387
  %v389 = vpop.f32.mrf.mxu0
  %v390 = vadd.f32 %v107, %v389
  %v391 = vpop.f32.mrf.mxu0
  %v392 = vadd.f32 %v111, %v391
  %393 = vdwg.mxu0
  %v426 = vunpack.c.l.b16 %v26
  %v427 = vunpack.c.h.b16 %v26
  %v428 = vunpack.c.l.b16 %v27
  %v429 = vunpack.c.h.b16 %v27
  %v430 = vunpack.c.l.b16 %v28
  %v431 = vunpack.c.h.b16 %v28
  %v432 = vunpack.c.l.b16 %v29
  %v433 = vunpack.c.h.b16 %v29
  %v434 = vunpack.c.l.b16 %v30
  %v435 = vunpack.c.h.b16 %v30
  %v436 = vunpack.c.l.b16 %v31
  %v437 = vunpack.c.h.b16 %v31
  %v438 = vunpack.c.l.b16 %v32
  %v439 = vunpack.c.h.b16 %v32
  %v440 = vunpack.c.l.b16 %v33
  %v441 = vunpack.c.h.b16 %v33
  %v442 = vunpack.c.l.b16 %v34
  %v443 = vunpack.c.h.b16 %v34
  %v444 = vunpack.c.l.b16 %v35
  %v445 = vunpack.c.h.b16 %v35
  %v446 = vunpack.c.l.b16 %v36
  %v447 = vunpack.c.h.b16 %v36
  %v448 = vunpack.c.l.b16 %v37
  %v449 = vunpack.c.h.b16 %v37
  %v450 = vunpack.c.l.b16 %v38
  %v451 = vunpack.c.h.b16 %v38
  %v452 = vunpack.c.l.b16 %v39
  %v453 = vunpack.c.h.b16 %v39
  %v454 = vunpack.c.l.b16 %v40
  %v455 = vunpack.c.h.b16 %v40
  %v456 = vunpack.c.l.b16 %v41
  %v457 = vunpack.c.h.b16 %v41
  %v458 = vunpack.c.l.b16 %v42
  %v459 = vunpack.c.h.b16 %v42
  %v460 = vunpack.c.l.b16 %v43
  %v461 = vunpack.c.h.b16 %v43
  %v462 = vunpack.c.l.b16 %v44
  %v463 = vunpack.c.h.b16 %v44
  %v464 = vunpack.c.l.b16 %v45
  %v465 = vunpack.c.h.b16 %v45
  %v466 = vunpack.c.l.b16 %v46
  %v467 = vunpack.c.h.b16 %v46
  %v468 = vunpack.c.l.b16 %v47
  %v469 = vunpack.c.h.b16 %v47
  %v470 = vunpack.c.l.b16 %v48
  %v471 = vunpack.c.h.b16 %v48
  %v472 = vunpack.c.l.b16 %v49
  %v473 = vunpack.c.h.b16 %v49
  %v474 = vunpack.c.l.b16 %v50
  %v475 = vunpack.c.h.b16 %v50
  %v476 = vunpack.c.l.b16 %v51
  %v477 = vunpack.c.h.b16 %v51
  %v478 = vunpack.c.l.b16 %v52
  %v479 = vunpack.c.h.b16 %v52
  %v480 = vunpack.c.l.b16 %v53
  %v481 = vunpack.c.h.b16 %v53
  %v482 = vunpack.c.l.b16 %v54
  %v483 = vunpack.c.h.b16 %v54
  %v484 = vunpack.c.l.b16 %v55
  %v485 = vunpack.c.h.b16 %v55
  %v486 = vunpack.c.l.b16 %v56
  %v487 = vunpack.c.h.b16 %v56
  %v488 = vunpack.c.l.b16 %v57
  %v489 = vunpack.c.h.b16 %v57
  %v490 = vpack.c.b16 %v430, %v426
  %v491 = vpack.c.b16 %v431, %v427
  %v492 = vpack.c.b16 %v432, %v428
  %v493 = vpack.c.b16 %v433, %v429
  %v494 = vpack.c.b16 %v438, %v434
  %v495 = vpack.c.b16 %v439, %v435
  %v496 = vpack.c.b16 %v440, %v436
  %v497 = vpack.c.b16 %v441, %v437
  %v498 = vpack.c.b16 %v446, %v442
  %v499 = vpack.c.b16 %v447, %v443
  %v500 = vpack.c.b16 %v448, %v444
  %v501 = vpack.c.b16 %v449, %v445
  %v502 = vpack.c.b16 %v454, %v450
  %v503 = vpack.c.b16 %v455, %v451
  %v504 = vpack.c.b16 %v456, %v452
  %v505 = vpack.c.b16 %v457, %v453
  %v506 = vpack.c.b16 %v462, %v458
  %v507 = vpack.c.b16 %v463, %v459
  %v508 = vpack.c.b16 %v464, %v460
  %v509 = vpack.c.b16 %v465, %v461
  %v510 = vpack.c.b16 %v470, %v466
  %v511 = vpack.c.b16 %v471, %v467
  %v512 = vpack.c.b16 %v472, %v468
  %v513 = vpack.c.b16 %v473, %v469
  %v514 = vpack.c.b16 %v478, %v474
  %v515 = vpack.c.b16 %v479, %v475
  %v516 = vpack.c.b16 %v480, %v476
  %v517 = vpack.c.b16 %v481, %v477
  %v518 = vpack.c.b16 %v486, %v482
  %v519 = vpack.c.b16 %v487, %v483
  %v520 = vpack.c.b16 %v488, %v484
  %v521 = vpack.c.b16 %v489, %v485
  %554 = vmatprep.subr.bf16.mxu0 %v519
  %555 = vmatpush1.bf16.msra.mxu0 %v518
  %556 = vmatprep.subr.bf16.mxu0 %v515
  %557 = vmatpush1.bf16.msra.mxu0 %v514
  %558 = vmatprep.subr.bf16.mxu0 %v511
  %559 = vmatpush1.bf16.msra.mxu0 %v510
  %560 = vmatprep.subr.bf16.mxu0 %v507
  %561 = vmatpush1.bf16.msra.mxu0 %v506
  %562 = vmatprep.subr.bf16.mxu0 %v503
  %563 = vmatpush1.bf16.msra.mxu0 %v502
  %564 = vmatprep.subr.bf16.mxu0 %v499
  %565 = vmatpush1.bf16.msra.mxu0 %v498
  %566 = vmatprep.subr.bf16.mxu0 %v495
  %567 = vmatpush1.bf16.msra.mxu0 %v494
  %568 = vmatprep.subr.bf16.mxu0 %v491
  %569 = vmatpush1.bf16.msra.mxu0 %v490
  %570 = vmatprep.subr.bf16.mxu0 0
  %571 = vmatpush2.bf16.msra.mxu0 0
  %572 = vmatprep.subr.bf16.mxu0 0
  %573 = vmatpush2.bf16.msra.mxu0 0
  %574 = vmatprep.subr.bf16.mxu0 0
  %575 = vmatpush2.bf16.msra.mxu0 0
  %576 = vmatprep.subr.bf16.mxu0 0
  %577 = vmatpush2.bf16.msra.mxu0 0
  %578 = vmatprep.subr.bf16.mxu0 0
  %579 = vmatpush2.bf16.msra.mxu0 0
  %580 = vmatprep.subr.bf16.mxu0 0
  %581 = vmatpush2.bf16.msra.mxu0 0
  %582 = vmatprep.subr.bf16.mxu0 0
  %583 = vmatpush2.bf16.msra.mxu0 0
  %584 = vmatprep.subr.bf16.mxu0 0
  %585 = vmatpush2.bf16.msra.mxu0 0
  %586 = vmatprep.mubr.bf16.mxu0 0
  %587 = vmatmul.mubr.bf16.gmra.mxu0 0
  %v588 = vpop.f32.mrf.mxu0
  %v589 = vadd.f32 0.0, %v588
  %v590 = vpop.f32.mrf.mxu0
  %v591 = vadd.f32 0.0, %v590
  %v592 = vpop.f32.mrf.mxu0
  %v593 = vpop.f32.mrf.mxu0
  %594 = vdwg.mxu0
  %595 = vmatprep.subr.bf16.mxu0 %v521
  %596 = vmatpush1.bf16.msra.mxu0 %v520
  %597 = vmatprep.subr.bf16.mxu0 %v517
  %598 = vmatpush1.bf16.msra.mxu0 %v516
  %599 = vmatprep.subr.bf16.mxu0 %v513
  %600 = vmatpush1.bf16.msra.mxu0 %v512
  %601 = vmatprep.subr.bf16.mxu0 %v509
  %602 = vmatpush1.bf16.msra.mxu0 %v508
  %603 = vmatprep.subr.bf16.mxu0 %v505
  %604 = vmatpush1.bf16.msra.mxu0 %v504
  %605 = vmatprep.subr.bf16.mxu0 %v501
  %606 = vmatpush1.bf16.msra.mxu0 %v500
  %607 = vmatprep.subr.bf16.mxu0 %v497
  %608 = vmatpush1.bf16.msra.mxu0 %v496
  %609 = vmatprep.subr.bf16.mxu0 %v493
  %610 = vmatpush1.bf16.msra.mxu0 %v492
  %611 = vmatprep.subr.bf16.mxu0 0
  %612 = vmatpush2.bf16.msra.mxu0 0
  %613 = vmatprep.subr.bf16.mxu0 0
  %614 = vmatpush2.bf16.msra.mxu0 0
  %615 = vmatprep.subr.bf16.mxu0 0
  %616 = vmatpush2.bf16.msra.mxu0 0
  %617 = vmatprep.subr.bf16.mxu0 0
  %618 = vmatpush2.bf16.msra.mxu0 0
  %619 = vmatprep.subr.bf16.mxu0 0
  %620 = vmatpush2.bf16.msra.mxu0 0
  %621 = vmatprep.subr.bf16.mxu0 0
  %622 = vmatpush2.bf16.msra.mxu0 0
  %623 = vmatprep.subr.bf16.mxu0 0
  %624 = vmatpush2.bf16.msra.mxu0 0
  %625 = vmatprep.subr.bf16.mxu0 0
  %626 = vmatpush2.bf16.msra.mxu0 0
  %627 = vmatprep.mubr.bf16.mxu0 0
  %628 = vmatmul.mubr.bf16.gmra.mxu0 0
  %v629 = vpop.f32.mrf.mxu0
  %v630 = vadd.f32 0.0, %v629
  %v631 = vpop.f32.mrf.mxu0
  %v632 = vadd.f32 0.0, %v631
  %v633 = vpop.f32.mrf.mxu0
  %v634 = vpop.f32.mrf.mxu0
  %635 = vdwg.mxu0
  %v636 = vadd.f32 %v323, %v589
  %v637 = vadd.f32 %v325, %v591
  %v638 = vadd.f32 %v376, %v630
  %v639 = vadd.f32 %v378, %v632
  %v640 = vxor.u32 %v636, 2147483648
  %v641 = vxor.u32 %v637, 2147483648
  %v642 = vxor.u32 %v638, 2147483648
  %v643 = vmul.f32 %v640, 1.442695
  %v644 = vpow.pop %v643
  %v645 = vmul.f32 %v641, 1.442695
  %v646 = vpow.pop %v645
  %v647 = vmul.f32 %v642, 1.442695
  %v648 = vpow.pop %v647
  %v649 = vadd.f32 %v644, 1.0
  %v650 = vadd.f32 %v646, 1.0
  %v651 = vadd.f32 %v648, 1.0
  %v652 = vrcp.pop %v649
  %v653 = vmul.f32 1.0, %v652
  %v654 = vrcp.pop %v650
  %v655 = vmul.f32 1.0, %v654
  %v656 = vrcp.pop %v651
  %v657 = vmul.f32 1.0, %v656
  %v658 = vtanh.pop %v639
  %v659 = vmul.f32 %v655, 0.0
  %v660 = vmul.f32 %v653, %v658
  %v661 = vadd.f32 %v659, %v660
  %v662 = vtanh.pop %v661
  %v663 = vmul.f32 %v657, %v662
  %v664 = vpack.c.bf16 %v663, %v663
  %665 = vmatprep.subr.bf16.mxu0 %v519
  %666 = vmatpush1.bf16.msra.mxu0 %v518
  %667 = vmatprep.subr.bf16.mxu0 %v515
  %668 = vmatpush1.bf16.msra.mxu0 %v514
  %669 = vmatprep.subr.bf16.mxu0 %v511
  %670 = vmatpush1.bf16.msra.mxu0 %v510
  %671 = vmatprep.subr.bf16.mxu0 %v507
  %672 = vmatpush1.bf16.msra.mxu0 %v506
  %673 = vmatprep.subr.bf16.mxu0 %v503
  %674 = vmatpush1.bf16.msra.mxu0 %v502
  %675 = vmatprep.subr.bf16.mxu0 %v499
  %676 = vmatpush1.bf16.msra.mxu0 %v498
  %677 = vmatprep.subr.bf16.mxu0 %v495
  %678 = vmatpush1.bf16.msra.mxu0 %v494
  %679 = vmatprep.subr.bf16.mxu0 %v491
  %680 = vmatpush1.bf16.msra.mxu0 %v490
  %681 = vmatprep.subr.bf16.mxu0 0
  %682 = vmatpush2.bf16.msra.mxu0 0
  %683 = vmatprep.subr.bf16.mxu0 0
  %684 = vmatpush2.bf16.msra.mxu0 0
  %685 = vmatprep.subr.bf16.mxu0 0
  %686 = vmatpush2.bf16.msra.mxu0 0
  %687 = vmatprep.subr.bf16.mxu0 0
  %688 = vmatpush2.bf16.msra.mxu0 0
  %689 = vmatprep.subr.bf16.mxu0 0
  %690 = vmatpush2.bf16.msra.mxu0 0
  %691 = vmatprep.subr.bf16.mxu0 0
  %692 = vmatpush2.bf16.msra.mxu0 0
  %693 = vmatprep.subr.bf16.mxu0 0
  %694 = vmatpush2.bf16.msra.mxu0 0
  %695 = vmatprep.subr.bf16.mxu0 0
  %696 = vmatpush2.bf16.msra.mxu0 0
  %697 = vmatprep.mubr.bf16.mxu0 0
  %698 = vmatmul.mubr.bf16.gmra.mxu0 %v664
  %v699 = vpop.f32.mrf.mxu0
  %v700 = vadd.f32 0.0, %v699
  %v701 = vpop.f32.mrf.mxu0
  %v702 = vadd.f32 0.0, %v701
  %v703 = vpop.f32.mrf.mxu0
  %v704 = vpop.f32.mrf.mxu0
  %705 = vdwg.mxu0
  %706 = vmatprep.subr.bf16.mxu0 %v521
  %707 = vmatpush1.bf16.msra.mxu0 %v520
  %708 = vmatprep.subr.bf16.mxu0 %v517
  %709 = vmatpush1.bf16.msra.mxu0 %v516
  %710 = vmatprep.subr.bf16.mxu0 %v513
  %711 = vmatpush1.bf16.msra.mxu0 %v512
  %712 = vmatprep.subr.bf16.mxu0 %v509
  %713 = vmatpush1.bf16.msra.mxu0 %v508
  %714 = vmatprep.subr.bf16.mxu0 %v505
  %715 = vmatpush1.bf16.msra.mxu0 %v504
  %716 = vmatprep.subr.bf16.mxu0 %v501
  %717 = vmatpush1.bf16.msra.mxu0 %v500
  %718 = vmatprep.subr.bf16.mxu0 %v497
  %719 = vmatpush1.bf16.msra.mxu0 %v496
  %720 = vmatprep.subr.bf16.mxu0 %v493
  %721 = vmatpush1.bf16.msra.mxu0 %v492
  %722 = vmatprep.subr.bf16.mxu0 0
  %723 = vmatpush2.bf16.msra.mxu0 0
  %724 = vmatprep.subr.bf16.mxu0 0
  %725 = vmatpush2.bf16.msra.mxu0 0
  %726 = vmatprep.subr.bf16.mxu0 0
  %727 = vmatpush2.bf16.msra.mxu0 0
  %728 = vmatprep.subr.bf16.mxu0 0
  %729 = vmatpush2.bf16.msra.mxu0 0
  %730 = vmatprep.subr.bf16.mxu0 0
  %731 = vmatpush2.bf16.msra.mxu0 0
  %732 = vmatprep.subr.bf16.mxu0 0
  %733 = vmatpush2.bf16.msra.mxu0 0
  %734 = vmatprep.subr.bf16.mxu0 0
  %735 = vmatpush2.bf16.msra.mxu0 0
  %736 = vmatprep.subr.bf16.mxu0 0
  %737 = vmatpush2.bf16.msra.mxu0 0
  %738 = vmatprep.mubr.bf16.mxu0 0
  %739 = vmatmul.mubr.bf16.gmra.mxu0 %v664
  %v740 = vpop.f32.mrf.mxu0
  %v741 = vadd.f32 0.0, %v740
  %v742 = vpop.f32.mrf.mxu0
  %v743 = vadd.f32 0.0, %v742
  %v744 = vpop.f32.mrf.mxu0
  %v745 = vpop.f32.mrf.mxu0
  %746 = vdwg.mxu0
  %v751 = vrot.slane %v700, 4
  %v752 = vrot.slane %v702, 4
  %v753 = vrot.slane %v741, 4
  %v754 = vrot.slane %v743, 4
  %v759 = vadd.f32 %v323, %v751
  %v760 = vadd.f32 %v325, %v752
  %v761 = vadd.f32 %v376, %v753
  %v762 = vadd.f32 %v378, %v754
  %v763 = vxor.u32 %v759, 2147483648
  %v764 = vxor.u32 %v760, 2147483648
  %v765 = vxor.u32 %v761, 2147483648
  %v766 = vmul.f32 %v763, 1.442695
  %v767 = vpow.pop %v766
  %v768 = vmul.f32 %v764, 1.442695
  %v769 = vpow.pop %v768
  %v770 = vmul.f32 %v765, 1.442695
  %v771 = vpow.pop %v770
  %v772 = vadd.f32 %v767, 1.0
  %v773 = vadd.f32 %v769, 1.0
  %v774 = vadd.f32 %v771, 1.0
  %v775 = vrcp.pop %v772
  %v776 = vmul.f32 1.0, %v775
  %v777 = vrcp.pop %v773
  %v778 = vmul.f32 1.0, %v777
  %v779 = vrcp.pop %v774
  %v780 = vmul.f32 1.0, %v779
  %v781 = vtanh.pop %v762
  %v783 = vrot.slane %v661, 4
  %v785 = vmul.f32 %v778, %v783
  %v786 = vmul.f32 %v776, %v781
  %v787 = vadd.f32 %v785, %v786
  %v788 = vtanh.pop %v787
  %v789 = vmul.f32 %v780, %v788
  %v790 = vpack.c.bf16 %v789, %v789
  %v792 = vrot.slane %v790, 2
  %794 = vmatprep.subr.bf16.mxu0 %v519
  %795 = vmatpush1.bf16.msra.mxu0 %v518
  %796 = vmatprep.subr.bf16.mxu0 %v515
  %797 = vmatpush1.bf16.msra.mxu0 %v514
  %798 = vmatprep.subr.bf16.mxu0 %v511
  %799 = vmatpush1.bf16.msra.mxu0 %v510
  %800 = vmatprep.subr.bf16.mxu0 %v507
  %801 = vmatpush1.bf16.msra.mxu0 %v506
  %802 = vmatprep.subr.bf16.mxu0 %v503
  %803 = vmatpush1.bf16.msra.mxu0 %v502
  %804 = vmatprep.subr.bf16.mxu0 %v499
  %805 = vmatpush1.bf16.msra.mxu0 %v498
  %806 = vmatprep.subr.bf16.mxu0 %v495
  %807 = vmatpush1.bf16.msra.mxu0 %v494
  %808 = vmatprep.subr.bf16.mxu0 %v491
  %809 = vmatpush1.bf16.msra.mxu0 %v490
  %810 = vmatprep.subr.bf16.mxu0 0
  %811 = vmatpush2.bf16.msra.mxu0 0
  %812 = vmatprep.subr.bf16.mxu0 0
  %813 = vmatpush2.bf16.msra.mxu0 0
  %814 = vmatprep.subr.bf16.mxu0 0
  %815 = vmatpush2.bf16.msra.mxu0 0
  %816 = vmatprep.subr.bf16.mxu0 0
  %817 = vmatpush2.bf16.msra.mxu0 0
  %818 = vmatprep.subr.bf16.mxu0 0
  %819 = vmatpush2.bf16.msra.mxu0 0
  %820 = vmatprep.subr.bf16.mxu0 0
  %821 = vmatpush2.bf16.msra.mxu0 0
  %822 = vmatprep.subr.bf16.mxu0 0
  %823 = vmatpush2.bf16.msra.mxu0 0
  %824 = vmatprep.subr.bf16.mxu0 0
  %825 = vmatpush2.bf16.msra.mxu0 0
  %826 = vmatprep.mubr.bf16.mxu0 0
  %827 = vmatmul.mubr.bf16.gmra.mxu0 %v792
  %v828 = vpop.f32.mrf.mxu0
  %v829 = vadd.f32 0.0, %v828
  %v830 = vpop.f32.mrf.mxu0
  %v831 = vadd.f32 0.0, %v830
  %v832 = vpop.f32.mrf.mxu0
  %v833 = vpop.f32.mrf.mxu0
  %834 = vdwg.mxu0
  %835 = vmatprep.subr.bf16.mxu0 %v521
  %836 = vmatpush1.bf16.msra.mxu0 %v520
  %837 = vmatprep.subr.bf16.mxu0 %v517
  %838 = vmatpush1.bf16.msra.mxu0 %v516
  %839 = vmatprep.subr.bf16.mxu0 %v513
  %840 = vmatpush1.bf16.msra.mxu0 %v512
  %841 = vmatprep.subr.bf16.mxu0 %v509
  %842 = vmatpush1.bf16.msra.mxu0 %v508
  %843 = vmatprep.subr.bf16.mxu0 %v505
  %844 = vmatpush1.bf16.msra.mxu0 %v504
  %845 = vmatprep.subr.bf16.mxu0 %v501
  %846 = vmatpush1.bf16.msra.mxu0 %v500
  %847 = vmatprep.subr.bf16.mxu0 %v497
  %848 = vmatpush1.bf16.msra.mxu0 %v496
  %849 = vmatprep.subr.bf16.mxu0 %v493
  %850 = vmatpush1.bf16.msra.mxu0 %v492
  %851 = vmatprep.subr.bf16.mxu0 0
  %852 = vmatpush2.bf16.msra.mxu0 0
  %853 = vmatprep.subr.bf16.mxu0 0
  %854 = vmatpush2.bf16.msra.mxu0 0
  %855 = vmatprep.subr.bf16.mxu0 0
  %856 = vmatpush2.bf16.msra.mxu0 0
  %857 = vmatprep.subr.bf16.mxu0 0
  %858 = vmatpush2.bf16.msra.mxu0 0
  %859 = vmatprep.subr.bf16.mxu0 0
  %860 = vmatpush2.bf16.msra.mxu0 0
  %861 = vmatprep.subr.bf16.mxu0 0
  %862 = vmatpush2.bf16.msra.mxu0 0
  %863 = vmatprep.subr.bf16.mxu0 0
  %864 = vmatpush2.bf16.msra.mxu0 0
  %865 = vmatprep.subr.bf16.mxu0 0
  %866 = vmatpush2.bf16.msra.mxu0 0
  %867 = vmatprep.mubr.bf16.mxu0 0
  %868 = vmatmul.mubr.bf16.gmra.mxu0 %v792
  %v869 = vpop.f32.mrf.mxu0
  %v870 = vadd.f32 0.0, %v869
  %v871 = vpop.f32.mrf.mxu0
  %v872 = vadd.f32 0.0, %v871
  %v873 = vpop.f32.mrf.mxu0
  %v874 = vpop.f32.mrf.mxu0
  %875 = vdwg.mxu0
  %v876 = vadd.f32 %v327, %v829
  %v877 = vadd.f32 %v329, %v831
  %v878 = vadd.f32 %v380, %v870
  %v879 = vadd.f32 %v382, %v872
  %v880 = vxor.u32 %v876, 2147483648
  %v881 = vxor.u32 %v877, 2147483648
  %v882 = vxor.u32 %v878, 2147483648
  %v883 = vmul.f32 %v880, 1.442695
  %v884 = vpow.pop %v883
  %v885 = vmul.f32 %v881, 1.442695
  %v886 = vpow.pop %v885
  %v887 = vmul.f32 %v882, 1.442695
  %v888 = vpow.pop %v887
  %v889 = vadd.f32 %v884, 1.0
  %v890 = vadd.f32 %v886, 1.0
  %v891 = vadd.f32 %v888, 1.0
  %v892 = vrcp.pop %v889
  %v893 = vmul.f32 1.0, %v892
  %v894 = vrcp.pop %v890
  %v895 = vmul.f32 1.0, %v894
  %v896 = vrcp.pop %v891
  %v897 = vmul.f32 1.0, %v896
  %v898 = vtanh.pop %v879
  %v900 = vrot.slane %v787, 4
  %v902 = vmul.f32 %v895, %v900
  %v903 = vmul.f32 %v893, %v898
  %v904 = vadd.f32 %v902, %v903
  %v905 = vtanh.pop %v904
  %v906 = vmul.f32 %v897, %v905
  %v907 = vpack.c.bf16 %v906, %v906
  %908 = vmatprep.subr.bf16.mxu0 %v519
  %909 = vmatpush1.bf16.msra.mxu0 %v518
  %910 = vmatprep.subr.bf16.mxu0 %v515
  %911 = vmatpush1.bf16.msra.mxu0 %v514
  %912 = vmatprep.subr.bf16.mxu0 %v511
  %913 = vmatpush1.bf16.msra.mxu0 %v510
  %914 = vmatprep.subr.bf16.mxu0 %v507
  %915 = vmatpush1.bf16.msra.mxu0 %v506
  %916 = vmatprep.subr.bf16.mxu0 %v503
  %917 = vmatpush1.bf16.msra.mxu0 %v502
  %918 = vmatprep.subr.bf16.mxu0 %v499
  %919 = vmatpush1.bf16.msra.mxu0 %v498
  %920 = vmatprep.subr.bf16.mxu0 %v495
  %921 = vmatpush1.bf16.msra.mxu0 %v494
  %922 = vmatprep.subr.bf16.mxu0 %v491
  %923 = vmatpush1.bf16.msra.mxu0 %v490
  %924 = vmatprep.subr.bf16.mxu0 0
  %925 = vmatpush2.bf16.msra.mxu0 0
  %926 = vmatprep.subr.bf16.mxu0 0
  %927 = vmatpush2.bf16.msra.mxu0 0
  %928 = vmatprep.subr.bf16.mxu0 0
  %929 = vmatpush2.bf16.msra.mxu0 0
  %930 = vmatprep.subr.bf16.mxu0 0
  %931 = vmatpush2.bf16.msra.mxu0 0
  %932 = vmatprep.subr.bf16.mxu0 0
  %933 = vmatpush2.bf16.msra.mxu0 0
  %934 = vmatprep.subr.bf16.mxu0 0
  %935 = vmatpush2.bf16.msra.mxu0 0
  %936 = vmatprep.subr.bf16.mxu0 0
  %937 = vmatpush2.bf16.msra.mxu0 0
  %938 = vmatprep.subr.bf16.mxu0 0
  %939 = vmatpush2.bf16.msra.mxu0 0
  %940 = vmatprep.mubr.bf16.mxu0 0
  %941 = vmatmul.mubr.bf16.gmra.mxu0 %v907
  %v942 = vpop.f32.mrf.mxu0
  %v943 = vadd.f32 0.0, %v942
  %v944 = vpop.f32.mrf.mxu0
  %v945 = vadd.f32 0.0, %v944
  %v946 = vpop.f32.mrf.mxu0
  %v947 = vpop.f32.mrf.mxu0
  %948 = vdwg.mxu0
  %949 = vmatprep.subr.bf16.mxu0 %v521
  %950 = vmatpush1.bf16.msra.mxu0 %v520
  %951 = vmatprep.subr.bf16.mxu0 %v517
  %952 = vmatpush1.bf16.msra.mxu0 %v516
  %953 = vmatprep.subr.bf16.mxu0 %v513
  %954 = vmatpush1.bf16.msra.mxu0 %v512
  %955 = vmatprep.subr.bf16.mxu0 %v509
  %956 = vmatpush1.bf16.msra.mxu0 %v508
  %957 = vmatprep.subr.bf16.mxu0 %v505
  %958 = vmatpush1.bf16.msra.mxu0 %v504
  %959 = vmatprep.subr.bf16.mxu0 %v501
  %960 = vmatpush1.bf16.msra.mxu0 %v500
  %961 = vmatprep.subr.bf16.mxu0 %v497
  %962 = vmatpush1.bf16.msra.mxu0 %v496
  %963 = vmatprep.subr.bf16.mxu0 %v493
  %964 = vmatpush1.bf16.msra.mxu0 %v492
  %965 = vmatprep.subr.bf16.mxu0 0
  %966 = vmatpush2.bf16.msra.mxu0 0
  %967 = vmatprep.subr.bf16.mxu0 0
  %968 = vmatpush2.bf16.msra.mxu0 0
  %969 = vmatprep.subr.bf16.mxu0 0
  %970 = vmatpush2.bf16.msra.mxu0 0
  %971 = vmatprep.subr.bf16.mxu0 0
  %972 = vmatpush2.bf16.msra.mxu0 0
  %973 = vmatprep.subr.bf16.mxu0 0
  %974 = vmatpush2.bf16.msra.mxu0 0
  %975 = vmatprep.subr.bf16.mxu0 0
  %976 = vmatpush2.bf16.msra.mxu0 0
  %977 = vmatprep.subr.bf16.mxu0 0
  %978 = vmatpush2.bf16.msra.mxu0 0
  %979 = vmatprep.subr.bf16.mxu0 0
  %980 = vmatpush2.bf16.msra.mxu0 0
  %981 = vmatprep.mubr.bf16.mxu0 0
  %982 = vmatmul.mubr.bf16.gmra.mxu0 %v907
  %v983 = vpop.f32.mrf.mxu0
  %v984 = vadd.f32 0.0, %v983
  %v985 = vpop.f32.mrf.mxu0
  %v986 = vadd.f32 0.0, %v985
  %v987 = vpop.f32.mrf.mxu0
  %v988 = vpop.f32.mrf.mxu0
  %989 = vdwg.mxu0
  %v994 = vrot.slane %v943, 4
  %v995 = vrot.slane %v945, 4
  %v996 = vrot.slane %v984, 4
  %v997 = vrot.slane %v986, 4
  %v1002 = vadd.f32 %v327, %v994
  %v1003 = vadd.f32 %v329, %v995
  %v1004 = vadd.f32 %v380, %v996
  %v1005 = vadd.f32 %v382, %v997
  %v1006 = vxor.u32 %v1002, 2147483648
  %v1007 = vxor.u32 %v1003, 2147483648
  %v1008 = vxor.u32 %v1004, 2147483648
  %v1009 = vmul.f32 %v1006, 1.442695
  %v1010 = vpow.pop %v1009
  %v1011 = vmul.f32 %v1007, 1.442695
  %v1012 = vpow.pop %v1011
  %v1013 = vmul.f32 %v1008, 1.442695
  %v1014 = vpow.pop %v1013
  %v1015 = vadd.f32 %v1010, 1.0
  %v1016 = vadd.f32 %v1012, 1.0
  %v1017 = vadd.f32 %v1014, 1.0
  %v1018 = vrcp.pop %v1015
  %v1019 = vmul.f32 1.0, %v1018
  %v1020 = vrcp.pop %v1016
  %v1021 = vmul.f32 1.0, %v1020
  %v1022 = vrcp.pop %v1017
  %v1023 = vmul.f32 1.0, %v1022
  %v1024 = vtanh.pop %v1005
  %v1026 = vrot.slane %v904, 4
  %v1028 = vmul.f32 %v1021, %v1026
  %v1029 = vmul.f32 %v1019, %v1024
  %v1030 = vadd.f32 %v1028, %v1029
  %v1031 = vtanh.pop %v1030
  %v1032 = vmul.f32 %v1023, %v1031
  %v1033 = vpack.c.bf16 %v1032, %v1032
  %v1035 = vrot.slane %v1033, 2
  %1037 = vmatprep.subr.bf16.mxu0 %v519
  %1038 = vmatpush1.bf16.msra.mxu0 %v518
  %1039 = vmatprep.subr.bf16.mxu0 %v515
  %1040 = vmatpush1.bf16.msra.mxu0 %v514
  %1041 = vmatprep.subr.bf16.mxu0 %v511
  %1042 = vmatpush1.bf16.msra.mxu0 %v510
  %1043 = vmatprep.subr.bf16.mxu0 %v507
  %1044 = vmatpush1.bf16.msra.mxu0 %v506
  %1045 = vmatprep.subr.bf16.mxu0 %v503
  %1046 = vmatpush1.bf16.msra.mxu0 %v502
  %1047 = vmatprep.subr.bf16.mxu0 %v499
  %1048 = vmatpush1.bf16.msra.mxu0 %v498
  %1049 = vmatprep.subr.bf16.mxu0 %v495
  %1050 = vmatpush1.bf16.msra.mxu0 %v494
  %1051 = vmatprep.subr.bf16.mxu0 %v491
  %1052 = vmatpush1.bf16.msra.mxu0 %v490
  %1053 = vmatprep.subr.bf16.mxu0 0
  %1054 = vmatpush2.bf16.msra.mxu0 0
  %1055 = vmatprep.subr.bf16.mxu0 0
  %1056 = vmatpush2.bf16.msra.mxu0 0
  %1057 = vmatprep.subr.bf16.mxu0 0
  %1058 = vmatpush2.bf16.msra.mxu0 0
  %1059 = vmatprep.subr.bf16.mxu0 0
  %1060 = vmatpush2.bf16.msra.mxu0 0
  %1061 = vmatprep.subr.bf16.mxu0 0
  %1062 = vmatpush2.bf16.msra.mxu0 0
  %1063 = vmatprep.subr.bf16.mxu0 0
  %1064 = vmatpush2.bf16.msra.mxu0 0
  %1065 = vmatprep.subr.bf16.mxu0 0
  %1066 = vmatpush2.bf16.msra.mxu0 0
  %1067 = vmatprep.subr.bf16.mxu0 0
  %1068 = vmatpush2.bf16.msra.mxu0 0
  %1069 = vmatprep.mubr.bf16.mxu0 0
  %1070 = vmatmul.mubr.bf16.gmra.mxu0 %v1035
  %v1071 = vpop.f32.mrf.mxu0
  %v1072 = vadd.f32 0.0, %v1071
  %v1073 = vpop.f32.mrf.mxu0
  %v1074 = vadd.f32 0.0, %v1073
  %v1075 = vpop.f32.mrf.mxu0
  %v1076 = vpop.f32.mrf.mxu0
  %1077 = vdwg.mxu0
  %1078 = vmatprep.subr.bf16.mxu0 %v521
  %1079 = vmatpush1.bf16.msra.mxu0 %v520
  %1080 = vmatprep.subr.bf16.mxu0 %v517
  %1081 = vmatpush1.bf16.msra.mxu0 %v516
  %1082 = vmatprep.subr.bf16.mxu0 %v513
  %1083 = vmatpush1.bf16.msra.mxu0 %v512
  %1084 = vmatprep.subr.bf16.mxu0 %v509
  %1085 = vmatpush1.bf16.msra.mxu0 %v508
  %1086 = vmatprep.subr.bf16.mxu0 %v505
  %1087 = vmatpush1.bf16.msra.mxu0 %v504
  %1088 = vmatprep.subr.bf16.mxu0 %v501
  %1089 = vmatpush1.bf16.msra.mxu0 %v500
  %1090 = vmatprep.subr.bf16.mxu0 %v497
  %1091 = vmatpush1.bf16.msra.mxu0 %v496
  %1092 = vmatprep.subr.bf16.mxu0 %v493
  %1093 = vmatpush1.bf16.msra.mxu0 %v492
  %1094 = vmatprep.subr.bf16.mxu0 0
  %1095 = vmatpush2.bf16.msra.mxu0 0
  %1096 = vmatprep.subr.bf16.mxu0 0
  %1097 = vmatpush2.bf16.msra.mxu0 0
  %1098 = vmatprep.subr.bf16.mxu0 0
  %1099 = vmatpush2.bf16.msra.mxu0 0
  %1100 = vmatprep.subr.bf16.mxu0 0
  %1101 = vmatpush2.bf16.msra.mxu0 0
  %1102 = vmatprep.subr.bf16.mxu0 0
  %1103 = vmatpush2.bf16.msra.mxu0 0
  %1104 = vmatprep.subr.bf16.mxu0 0
  %1105 = vmatpush2.bf16.msra.mxu0 0
  %1106 = vmatprep.subr.bf16.mxu0 0
  %1107 = vmatpush2.bf16.msra.mxu0 0
  %1108 = vmatprep.subr.bf16.mxu0 0
  %1109 = vmatpush2.bf16.msra.mxu0 0
  %1110 = vmatprep.mubr.bf16.mxu0 0
  %1111 = vmatmul.mubr.bf16.gmra.mxu0 %v1035
  %v1112 = vpop.f32.mrf.mxu0
  %v1113 = vadd.f32 0.0, %v1112
  %v1114 = vpop.f32.mrf.mxu0
  %v1115 = vadd.f32 0.0, %v1114
  %v1116 = vpop.f32.mrf.mxu0
  %v1117 = vpop.f32.mrf.mxu0
  %1118 = vdwg.mxu0
  %v1119 = vadd.f32 %v333, %v1072
  %v1120 = vadd.f32 %v335, %v1074
  %v1121 = vadd.f32 %v386, %v1113
  %v1122 = vadd.f32 %v388, %v1115
  %v1123 = vxor.u32 %v1119, 2147483648
  %v1124 = vxor.u32 %v1120, 2147483648
  %v1125 = vxor.u32 %v1121, 2147483648
  %v1126 = vmul.f32 %v1123, 1.442695
  %v1127 = vpow.pop %v1126
  %v1128 = vmul.f32 %v1124, 1.442695
  %v1129 = vpow.pop %v1128
  %v1130 = vmul.f32 %v1125, 1.442695
  %v1131 = vpow.pop %v1130
  %v1132 = vadd.f32 %v1127, 1.0
  %v1133 = vadd.f32 %v1129, 1.0
  %v1134 = vadd.f32 %v1131, 1.0
  %v1135 = vrcp.pop %v1132
  %v1136 = vmul.f32 1.0, %v1135
  %v1137 = vrcp.pop %v1133
  %v1138 = vmul.f32 1.0, %v1137
  %v1139 = vrcp.pop %v1134
  %v1140 = vmul.f32 1.0, %v1139
  %v1141 = vtanh.pop %v1122
  %v1143 = vrot.slane %v1030, 4
  %v1145 = vmul.f32 %v1138, %v1143
  %v1146 = vmul.f32 %v1136, %v1141
  %v1147 = vadd.f32 %v1145, %v1146
  %v1148 = vtanh.pop %v1147
  %v1149 = vmul.f32 %v1140, %v1148
  %v1150 = vpack.c.bf16 %v1149, %v1149
  %1151 = vmatprep.subr.bf16.mxu0 %v519
  %1152 = vmatpush1.bf16.msra.mxu0 %v518
  %1153 = vmatprep.subr.bf16.mxu0 %v515
  %1154 = vmatpush1.bf16.msra.mxu0 %v514
  %1155 = vmatprep.subr.bf16.mxu0 %v511
  %1156 = vmatpush1.bf16.msra.mxu0 %v510
  %1157 = vmatprep.subr.bf16.mxu0 %v507
  %1158 = vmatpush1.bf16.msra.mxu0 %v506
  %1159 = vmatprep.subr.bf16.mxu0 %v503
  %1160 = vmatpush1.bf16.msra.mxu0 %v502
  %1161 = vmatprep.subr.bf16.mxu0 %v499
  %1162 = vmatpush1.bf16.msra.mxu0 %v498
  %1163 = vmatprep.subr.bf16.mxu0 %v495
  %1164 = vmatpush1.bf16.msra.mxu0 %v494
  %1165 = vmatprep.subr.bf16.mxu0 %v491
  %1166 = vmatpush1.bf16.msra.mxu0 %v490
  %1167 = vmatprep.subr.bf16.mxu0 0
  %1168 = vmatpush2.bf16.msra.mxu0 0
  %1169 = vmatprep.subr.bf16.mxu0 0
  %1170 = vmatpush2.bf16.msra.mxu0 0
  %1171 = vmatprep.subr.bf16.mxu0 0
  %1172 = vmatpush2.bf16.msra.mxu0 0
  %1173 = vmatprep.subr.bf16.mxu0 0
  %1174 = vmatpush2.bf16.msra.mxu0 0
  %1175 = vmatprep.subr.bf16.mxu0 0
  %1176 = vmatpush2.bf16.msra.mxu0 0
  %1177 = vmatprep.subr.bf16.mxu0 0
  %1178 = vmatpush2.bf16.msra.mxu0 0
  %1179 = vmatprep.subr.bf16.mxu0 0
  %1180 = vmatpush2.bf16.msra.mxu0 0
  %1181 = vmatprep.subr.bf16.mxu0 0
  %1182 = vmatpush2.bf16.msra.mxu0 0
  %1183 = vmatprep.mubr.bf16.mxu0 0
  %1184 = vmatmul.mubr.bf16.gmra.mxu0 %v1150
  %v1185 = vpop.f32.mrf.mxu0
  %v1186 = vadd.f32 0.0, %v1185
  %v1187 = vpop.f32.mrf.mxu0
  %v1188 = vadd.f32 0.0, %v1187
  %v1189 = vpop.f32.mrf.mxu0
  %v1190 = vpop.f32.mrf.mxu0
  %1191 = vdwg.mxu0
  %1192 = vmatprep.subr.bf16.mxu0 %v521
  %1193 = vmatpush1.bf16.msra.mxu0 %v520
  %1194 = vmatprep.subr.bf16.mxu0 %v517
  %1195 = vmatpush1.bf16.msra.mxu0 %v516
  %1196 = vmatprep.subr.bf16.mxu0 %v513
  %1197 = vmatpush1.bf16.msra.mxu0 %v512
  %1198 = vmatprep.subr.bf16.mxu0 %v509
  %1199 = vmatpush1.bf16.msra.mxu0 %v508
  %1200 = vmatprep.subr.bf16.mxu0 %v505
  %1201 = vmatpush1.bf16.msra.mxu0 %v504
  %1202 = vmatprep.subr.bf16.mxu0 %v501
  %1203 = vmatpush1.bf16.msra.mxu0 %v500
  %1204 = vmatprep.subr.bf16.mxu0 %v497
  %1205 = vmatpush1.bf16.msra.mxu0 %v496
  %1206 = vmatprep.subr.bf16.mxu0 %v493
  %1207 = vmatpush1.bf16.msra.mxu0 %v492
  %1208 = vmatprep.subr.bf16.mxu0 0
  %1209 = vmatpush2.bf16.msra.mxu0 0
  %1210 = vmatprep.subr.bf16.mxu0 0
  %1211 = vmatpush2.bf16.msra.mxu0 0
  %1212 = vmatprep.subr.bf16.mxu0 0
  %1213 = vmatpush2.bf16.msra.mxu0 0
  %1214 = vmatprep.subr.bf16.mxu0 0
  %1215 = vmatpush2.bf16.msra.mxu0 0
  %1216 = vmatprep.subr.bf16.mxu0 0
  %1217 = vmatpush2.bf16.msra.mxu0 0
  %1218 = vmatprep.subr.bf16.mxu0 0
  %1219 = vmatpush2.bf16.msra.mxu0 0
  %1220 = vmatprep.subr.bf16.mxu0 0
  %1221 = vmatpush2.bf16.msra.mxu0 0
  %1222 = vmatprep.subr.bf16.mxu0 0
  %1223 = vmatpush2.bf16.msra.mxu0 0
  %1224 = vmatprep.mubr.bf16.mxu0 0
  %1225 = vmatmul.mubr.bf16.gmra.mxu0 %v1150
  %v1226 = vpop.f32.mrf.mxu0
  %v1227 = vadd.f32 0.0, %v1226
  %v1228 = vpop.f32.mrf.mxu0
  %v1229 = vadd.f32 0.0, %v1228
  %v1230 = vpop.f32.mrf.mxu0
  %v1231 = vpop.f32.mrf.mxu0
  %1232 = vdwg.mxu0
  %v1237 = vrot.slane %v1186, 4
  %v1238 = vrot.slane %v1188, 4
  %v1239 = vrot.slane %v1227, 4
  %v1240 = vrot.slane %v1229, 4
  %v1245 = vadd.f32 %v333, %v1237
  %v1246 = vadd.f32 %v335, %v1238
  %v1247 = vadd.f32 %v386, %v1239
  %v1248 = vadd.f32 %v388, %v1240
  %v1249 = vxor.u32 %v1245, 2147483648
  %v1250 = vxor.u32 %v1246, 2147483648
  %v1251 = vxor.u32 %v1247, 2147483648
  %v1252 = vmul.f32 %v1249, 1.442695
  %v1253 = vpow.pop %v1252
  %v1254 = vmul.f32 %v1250, 1.442695
  %v1255 = vpow.pop %v1254
  %v1256 = vmul.f32 %v1251, 1.442695
  %v1257 = vpow.pop %v1256
  %v1258 = vadd.f32 %v1253, 1.0
  %v1259 = vadd.f32 %v1255, 1.0
  %v1260 = vadd.f32 %v1257, 1.0
  %v1261 = vrcp.pop %v1258
  %v1262 = vmul.f32 1.0, %v1261
  %v1263 = vrcp.pop %v1259
  %v1264 = vmul.f32 1.0, %v1263
  %v1265 = vrcp.pop %v1260
  %v1266 = vmul.f32 1.0, %v1265
  %v1267 = vtanh.pop %v1248
  %v1269 = vrot.slane %v1147, 4
  %v1271 = vmul.f32 %v1264, %v1269
  %v1272 = vmul.f32 %v1262, %v1267
  %v1273 = vadd.f32 %v1271, %v1272
  %v1274 = vtanh.pop %v1273
  %v1275 = vmul.f32 %v1266, %v1274
  %v1276 = vpack.c.bf16 %v1275, %v1275
  %v1278 = vrot.slane %v1276, 2
  %1280 = vmatprep.subr.bf16.mxu0 %v519
  %1281 = vmatpush1.bf16.msra.mxu0 %v518
  %1282 = vmatprep.subr.bf16.mxu0 %v515
  %1283 = vmatpush1.bf16.msra.mxu0 %v514
  %1284 = vmatprep.subr.bf16.mxu0 %v511
  %1285 = vmatpush1.bf16.msra.mxu0 %v510
  %1286 = vmatprep.subr.bf16.mxu0 %v507
  %1287 = vmatpush1.bf16.msra.mxu0 %v506
  %1288 = vmatprep.subr.bf16.mxu0 %v503
  %1289 = vmatpush1.bf16.msra.mxu0 %v502
  %1290 = vmatprep.subr.bf16.mxu0 %v499
  %1291 = vmatpush1.bf16.msra.mxu0 %v498
  %1292 = vmatprep.subr.bf16.mxu0 %v495
  %1293 = vmatpush1.bf16.msra.mxu0 %v494
  %1294 = vmatprep.subr.bf16.mxu0 %v491
  %1295 = vmatpush1.bf16.msra.mxu0 %v490
  %1296 = vmatprep.subr.bf16.mxu0 0
  %1297 = vmatpush2.bf16.msra.mxu0 0
  %1298 = vmatprep.subr.bf16.mxu0 0
  %1299 = vmatpush2.bf16.msra.mxu0 0
  %1300 = vmatprep.subr.bf16.mxu0 0
  %1301 = vmatpush2.bf16.msra.mxu0 0
  %1302 = vmatprep.subr.bf16.mxu0 0
  %1303 = vmatpush2.bf16.msra.mxu0 0
  %1304 = vmatprep.subr.bf16.mxu0 0
  %1305 = vmatpush2.bf16.msra.mxu0 0
  %1306 = vmatprep.subr.bf16.mxu0 0
  %1307 = vmatpush2.bf16.msra.mxu0 0
  %1308 = vmatprep.subr.bf16.mxu0 0
  %1309 = vmatpush2.bf16.msra.mxu0 0
  %1310 = vmatprep.subr.bf16.mxu0 0
  %1311 = vmatpush2.bf16.msra.mxu0 0
  %1312 = vmatprep.mubr.bf16.mxu0 0
  %1313 = vmatmul.mubr.bf16.gmra.mxu0 %v1278
  %v1314 = vpop.f32.mrf.mxu0
  %v1315 = vadd.f32 0.0, %v1314
  %v1316 = vpop.f32.mrf.mxu0
  %v1317 = vadd.f32 0.0, %v1316
  %v1318 = vpop.f32.mrf.mxu0
  %v1319 = vpop.f32.mrf.mxu0
  %1320 = vdwg.mxu0
  %1321 = vmatprep.subr.bf16.mxu0 %v521
  %1322 = vmatpush1.bf16.msra.mxu0 %v520
  %1323 = vmatprep.subr.bf16.mxu0 %v517
  %1324 = vmatpush1.bf16.msra.mxu0 %v516
  %1325 = vmatprep.subr.bf16.mxu0 %v513
  %1326 = vmatpush1.bf16.msra.mxu0 %v512
  %1327 = vmatprep.subr.bf16.mxu0 %v509
  %1328 = vmatpush1.bf16.msra.mxu0 %v508
  %1329 = vmatprep.subr.bf16.mxu0 %v505
  %1330 = vmatpush1.bf16.msra.mxu0 %v504
  %1331 = vmatprep.subr.bf16.mxu0 %v501
  %1332 = vmatpush1.bf16.msra.mxu0 %v500
  %1333 = vmatprep.subr.bf16.mxu0 %v497
  %1334 = vmatpush1.bf16.msra.mxu0 %v496
  %1335 = vmatprep.subr.bf16.mxu0 %v493
  %1336 = vmatpush1.bf16.msra.mxu0 %v492
  %1337 = vmatprep.subr.bf16.mxu0 0
  %1338 = vmatpush2.bf16.msra.mxu0 0
  %1339 = vmatprep.subr.bf16.mxu0 0
  %1340 = vmatpush2.bf16.msra.mxu0 0
  %1341 = vmatprep.subr.bf16.mxu0 0
  %1342 = vmatpush2.bf16.msra.mxu0 0
  %1343 = vmatprep.subr.bf16.mxu0 0
  %1344 = vmatpush2.bf16.msra.mxu0 0
  %1345 = vmatprep.subr.bf16.mxu0 0
  %1346 = vmatpush2.bf16.msra.mxu0 0
  %1347 = vmatprep.subr.bf16.mxu0 0
  %1348 = vmatpush2.bf16.msra.mxu0 0
  %1349 = vmatprep.subr.bf16.mxu0 0
  %1350 = vmatpush2.bf16.msra.mxu0 0
  %1351 = vmatprep.subr.bf16.mxu0 0
  %1352 = vmatpush2.bf16.msra.mxu0 0
  %1353 = vmatprep.mubr.bf16.mxu0 0
  %1354 = vmatmul.mubr.bf16.gmra.mxu0 %v1278
  %v1355 = vpop.f32.mrf.mxu0
  %v1356 = vadd.f32 0.0, %v1355
  %v1357 = vpop.f32.mrf.mxu0
  %v1358 = vadd.f32 0.0, %v1357
  %v1359 = vpop.f32.mrf.mxu0
  %v1360 = vpop.f32.mrf.mxu0
  %1361 = vdwg.mxu0
  %v1362 = vadd.f32 %v337, %v1315
  %v1363 = vadd.f32 %v339, %v1317
  %v1364 = vadd.f32 %v390, %v1356
  %v1365 = vadd.f32 %v392, %v1358
  %v1366 = vxor.u32 %v1362, 2147483648
  %v1367 = vxor.u32 %v1363, 2147483648
  %v1368 = vxor.u32 %v1364, 2147483648
  %v1369 = vmul.f32 %v1366, 1.442695
  %v1370 = vpow.pop %v1369
  %v1371 = vmul.f32 %v1367, 1.442695
  %v1372 = vpow.pop %v1371
  %v1373 = vmul.f32 %v1368, 1.442695
  %v1374 = vpow.pop %v1373
  %v1375 = vadd.f32 %v1370, 1.0
  %v1376 = vadd.f32 %v1372, 1.0
  %v1377 = vadd.f32 %v1374, 1.0
  %v1378 = vrcp.pop %v1375
  %v1379 = vmul.f32 1.0, %v1378
  %v1380 = vrcp.pop %v1376
  %v1381 = vmul.f32 1.0, %v1380
  %v1382 = vrcp.pop %v1377
  %v1383 = vmul.f32 1.0, %v1382
  %v1384 = vtanh.pop %v1365
  %v1386 = vrot.slane %v1273, 4
  %v1388 = vmul.f32 %v1381, %v1386
  %v1389 = vmul.f32 %v1379, %v1384
  %v1390 = vadd.f32 %v1388, %v1389
  %v1391 = vtanh.pop %v1390
  %v1392 = vmul.f32 %v1383, %v1391
  %v1393 = vpack.c.bf16 %v1392, %v1392
  %1394 = vmatprep.subr.bf16.mxu0 %v519
  %1395 = vmatpush1.bf16.msra.mxu0 %v518
  %1396 = vmatprep.subr.bf16.mxu0 %v515
  %1397 = vmatpush1.bf16.msra.mxu0 %v514
  %1398 = vmatprep.subr.bf16.mxu0 %v511
  %1399 = vmatpush1.bf16.msra.mxu0 %v510
  %1400 = vmatprep.subr.bf16.mxu0 %v507
  %1401 = vmatpush1.bf16.msra.mxu0 %v506
  %1402 = vmatprep.subr.bf16.mxu0 %v503
  %1403 = vmatpush1.bf16.msra.mxu0 %v502
  %1404 = vmatprep.subr.bf16.mxu0 %v499
  %1405 = vmatpush1.bf16.msra.mxu0 %v498
  %1406 = vmatprep.subr.bf16.mxu0 %v495
  %1407 = vmatpush1.bf16.msra.mxu0 %v494
  %1408 = vmatprep.subr.bf16.mxu0 %v491
  %1409 = vmatpush1.bf16.msra.mxu0 %v490
  %1410 = vmatprep.subr.bf16.mxu0 0
  %1411 = vmatpush2.bf16.msra.mxu0 0
  %1412 = vmatprep.subr.bf16.mxu0 0
  %1413 = vmatpush2.bf16.msra.mxu0 0
  %1414 = vmatprep.subr.bf16.mxu0 0
  %1415 = vmatpush2.bf16.msra.mxu0 0
  %1416 = vmatprep.subr.bf16.mxu0 0
  %1417 = vmatpush2.bf16.msra.mxu0 0
  %1418 = vmatprep.subr.bf16.mxu0 0
  %1419 = vmatpush2.bf16.msra.mxu0 0
  %1420 = vmatprep.subr.bf16.mxu0 0
  %1421 = vmatpush2.bf16.msra.mxu0 0
  %1422 = vmatprep.subr.bf16.mxu0 0
  %1423 = vmatpush2.bf16.msra.mxu0 0
  %1424 = vmatprep.subr.bf16.mxu0 0
  %1425 = vmatpush2.bf16.msra.mxu0 0
  %1426 = vmatprep.mubr.bf16.mxu0 0
  %1427 = vmatmul.mubr.bf16.gmra.mxu0 %v1393
  %v1428 = vpop.f32.mrf.mxu0
  %v1429 = vadd.f32 0.0, %v1428
  %v1430 = vpop.f32.mrf.mxu0
  %v1431 = vadd.f32 0.0, %v1430
  %v1432 = vpop.f32.mrf.mxu0
  %v1433 = vpop.f32.mrf.mxu0
  %1434 = vdwg.mxu0
  %1435 = vmatprep.subr.bf16.mxu0 %v521
  %1436 = vmatpush1.bf16.msra.mxu0 %v520
  %1437 = vmatprep.subr.bf16.mxu0 %v517
  %1438 = vmatpush1.bf16.msra.mxu0 %v516
  %1439 = vmatprep.subr.bf16.mxu0 %v513
  %1440 = vmatpush1.bf16.msra.mxu0 %v512
  %1441 = vmatprep.subr.bf16.mxu0 %v509
  %1442 = vmatpush1.bf16.msra.mxu0 %v508
  %1443 = vmatprep.subr.bf16.mxu0 %v505
  %1444 = vmatpush1.bf16.msra.mxu0 %v504
  %1445 = vmatprep.subr.bf16.mxu0 %v501
  %1446 = vmatpush1.bf16.msra.mxu0 %v500
  %1447 = vmatprep.subr.bf16.mxu0 %v497
  %1448 = vmatpush1.bf16.msra.mxu0 %v496
  %1449 = vmatprep.subr.bf16.mxu0 %v493
  %1450 = vmatpush1.bf16.msra.mxu0 %v492
  %1451 = vmatprep.subr.bf16.mxu0 0
  %1452 = vmatpush2.bf16.msra.mxu0 0
  %1453 = vmatprep.subr.bf16.mxu0 0
  %1454 = vmatpush2.bf16.msra.mxu0 0
  %1455 = vmatprep.subr.bf16.mxu0 0
  %1456 = vmatpush2.bf16.msra.mxu0 0
  %1457 = vmatprep.subr.bf16.mxu0 0
  %1458 = vmatpush2.bf16.msra.mxu0 0
  %1459 = vmatprep.subr.bf16.mxu0 0
  %1460 = vmatpush2.bf16.msra.mxu0 0
  %1461 = vmatprep.subr.bf16.mxu0 0
  %1462 = vmatpush2.bf16.msra.mxu0 0
  %1463 = vmatprep.subr.bf16.mxu0 0
  %1464 = vmatpush2.bf16.msra.mxu0 0
  %1465 = vmatprep.subr.bf16.mxu0 0
  %1466 = vmatpush2.bf16.msra.mxu0 0
  %1467 = vmatprep.mubr.bf16.mxu0 0
  %1468 = vmatmul.mubr.bf16.gmra.mxu0 %v1393
  %v1469 = vpop.f32.mrf.mxu0
  %v1470 = vadd.f32 0.0, %v1469
  %v1471 = vpop.f32.mrf.mxu0
  %v1472 = vadd.f32 0.0, %v1471
  %v1473 = vpop.f32.mrf.mxu0
  %v1474 = vpop.f32.mrf.mxu0
  %1475 = vdwg.mxu0
  %v1480 = vrot.slane %v1429, 4
  %v1481 = vrot.slane %v1431, 4
  %v1482 = vrot.slane %v1470, 4
  %v1483 = vrot.slane %v1472, 4
  %v1488 = vadd.f32 %v337, %v1480
  %v1489 = vadd.f32 %v339, %v1481
  %v1490 = vadd.f32 %v390, %v1482
  %v1491 = vadd.f32 %v392, %v1483
  %v1492 = vxor.u32 %v1488, 2147483648
  %v1493 = vxor.u32 %v1489, 2147483648
  %v1494 = vxor.u32 %v1490, 2147483648
  %v1495 = vmul.f32 %v1492, 1.442695
  %v1496 = vpow.pop %v1495
  %v1497 = vmul.f32 %v1493, 1.442695
  %v1498 = vpow.pop %v1497
  %v1499 = vmul.f32 %v1494, 1.442695
  %v1500 = vpow.pop %v1499
  %v1501 = vadd.f32 %v1496, 1.0
  %v1502 = vadd.f32 %v1498, 1.0
  %v1503 = vadd.f32 %v1500, 1.0
  %v1504 = vrcp.pop %v1501
  %v1505 = vmul.f32 1.0, %v1504
  %v1506 = vrcp.pop %v1502
  %v1507 = vmul.f32 1.0, %v1506
  %v1508 = vrcp.pop %v1503
  %v1509 = vmul.f32 1.0, %v1508
  %v1510 = vtanh.pop %v1491
  %v1512 = vrot.slane %v1390, 4
  %v1514 = vmul.f32 %v1507, %v1512
  %v1515 = vmul.f32 %v1505, %v1510
  %v1516 = vadd.f32 %v1514, %v1515
  %v1517 = vtanh.pop %v1516
  %v1518 = vmul.f32 %v1509, %v1517
  %v1519 = vpack.c.bf16 %v1518, %v1518
  %v1520 = vld [vmem:[%s4] sm:$0xf]
  %v1521 = vld [vmem:[%s4 + $0x4] sm:$0xf]
  %v1522 = vld [vmem:[%s4 + $0x8] sm:$0xf]
  %v1523 = vld [vmem:[%s4 + $0xc] sm:$0xf]
  %v1524 = vld [vmem:[%s4 + $0x10] sm:$0xf]
  %v1525 = vld [vmem:[%s4 + $0x14] sm:$0xf]
  %v1526 = vld [vmem:[%s4 + $0x18] sm:$0xf]
  %v1527 = vld [vmem:[%s4 + $0x1c] sm:$0xf]
  %v1528 = vld [vmem:[%s4 + $0x20] sm:$0xf]
  %v1529 = vld [vmem:[%s4 + $0x24] sm:$0xf]
  %v1530 = vld [vmem:[%s4 + $0x28] sm:$0xf]
  %v1531 = vld [vmem:[%s4 + $0x2c] sm:$0xf]
  %v1532 = vld [vmem:[%s4 + $0x30] sm:$0xf]
  %v1533 = vld [vmem:[%s4 + $0x34] sm:$0xf]
  %v1534 = vld [vmem:[%s4 + $0x38] sm:$0xf]
  %v1535 = vld [vmem:[%s4 + $0x3c] sm:$0xf]
  %v1536 = vld [vmem:[#allocation2] sm:$0x1]
  %v1538 = vlaneseq
  %v1539 = vshrl.u32 %v1538, 7
  %v1540 = vsub.s32 0, %v1539
  %v1541 = vrot.slane %v1536, %v1540
  %v1544 = vrot.slane %v1519, 2
  %v1562 = vunpack.c.l.b16 %v1520
  %v1563 = vunpack.c.l.b16 %v1521
  %v1564 = vunpack.c.l.b16 %v1522
  %v1565 = vunpack.c.l.b16 %v1523
  %v1566 = vunpack.c.l.b16 %v1524
  %v1567 = vunpack.c.l.b16 %v1525
  %v1568 = vunpack.c.l.b16 %v1526
  %v1569 = vunpack.c.l.b16 %v1527
  %v1570 = vunpack.c.l.b16 %v1528
  %v1571 = vunpack.c.l.b16 %v1529
  %v1572 = vunpack.c.l.b16 %v1530
  %v1573 = vunpack.c.l.b16 %v1531
  %v1574 = vunpack.c.l.b16 %v1532
  %v1575 = vunpack.c.l.b16 %v1533
  %v1576 = vunpack.c.l.b16 %v1534
  %v1577 = vunpack.c.l.b16 %v1535
  %v1578 = vpack.c.b16 %v1563, %v1562
  %v1579 = vpack.c.b16 %v1565, %v1564
  %v1580 = vpack.c.b16 %v1567, %v1566
  %v1581 = vpack.c.b16 %v1569, %v1568
  %v1582 = vpack.c.b16 %v1571, %v1570
  %v1583 = vpack.c.b16 %v1573, %v1572
  %v1584 = vpack.c.b16 %v1575, %v1574
  %v1585 = vpack.c.b16 %v1577, %v1576
  %1594 = vmatprep.subr.bf16.mxu0 0
  %1595 = vmatpush1.bf16.msra.mxu0 %v1585
  %1596 = vmatprep.subr.bf16.mxu0 0
  %1597 = vmatpush1.bf16.msra.mxu0 %v1584
  %1598 = vmatprep.subr.bf16.mxu0 0
  %1599 = vmatpush1.bf16.msra.mxu0 %v1583
  %1600 = vmatprep.subr.bf16.mxu0 0
  %1601 = vmatpush1.bf16.msra.mxu0 %v1582
  %1602 = vmatprep.subr.bf16.mxu0 0
  %1603 = vmatpush1.bf16.msra.mxu0 %v1581
  %1604 = vmatprep.subr.bf16.mxu0 0
  %1605 = vmatpush1.bf16.msra.mxu0 %v1580
  %1606 = vmatprep.subr.bf16.mxu0 0
  %1607 = vmatpush1.bf16.msra.mxu0 %v1579
  %1608 = vmatprep.subr.bf16.mxu0 0
  %1609 = vmatpush1.bf16.msra.mxu0 %v1578
  %1610 = vmatprep.subr.bf16.mxu0 0
  %1611 = vmatpush2.bf16.msra.mxu0 0
  %1612 = vmatprep.subr.bf16.mxu0 0
  %1613 = vmatpush2.bf16.msra.mxu0 0
  %1614 = vmatprep.subr.bf16.mxu0 0
  %1615 = vmatpush2.bf16.msra.mxu0 0
  %1616 = vmatprep.subr.bf16.mxu0 0
  %1617 = vmatpush2.bf16.msra.mxu0 0
  %1618 = vmatprep.subr.bf16.mxu0 0
  %1619 = vmatpush2.bf16.msra.mxu0 0
  %1620 = vmatprep.subr.bf16.mxu0 0
  %1621 = vmatpush2.bf16.msra.mxu0 0
  %1622 = vmatprep.subr.bf16.mxu0 0
  %1623 = vmatpush2.bf16.msra.mxu0 0
  %1624 = vmatprep.subr.bf16.mxu0 0
  %1625 = vmatpush2.bf16.msra.mxu0 0
  %1626 = vmatprep.mubr.bf16.mxu0 0
  %1627 = vmatmul.mubr.bf16.gmra.mxu0 %v1544
  %v1628 = vpop.f32.mrf.mxu0
  %v1629 = vadd.f32 %v1541, %v1628
  %v1630 = vpop.f32.mrf.mxu0
  %v1631 = vpop.f32.mrf.mxu0
  %v1632 = vpop.f32.mrf.mxu0
  %1633 = vdwg.mxu0
  %vm1634 = vcmask 3072
  %1635 = vst.msk [vmem:[%s6] sm:$0xf] %vm1634, %v1629
  // Predicated region
  $region26: #{quora_forward.1} parent=0 // pred_check
    _
  $region27: #{quora_forward.1} parent=0 // pred_check_branch
    %1637 = sbr.rel (0) target = $region29
  $region28: #{quora_forward.1} parent=0 // pred_region
    _
  $region29: #{quora_forward.1} parent=0 // pred_fallthru
    _
  // Predicated region
  $region30: #{quora_forward.1} parent=0 // pred_check
    _
  $region31: #{quora_forward.1} parent=0 // pred_check_branch
    %1639 = sbr.rel (0) target = $region33
  $region32: #{quora_forward.1} parent=0 // pred_region
    _
  $region33: #{quora_forward.1} parent=0 // pred_fallthru
    _

</llo_original>
